<compile_context>
chip_gen: v7x
topology: tpu7x:2x2x1
jax: 0.10.0
libtpu: 0.0.40
codegen_flags: <defaults>
</compile_context>

<pallas_src>
import math
import functools

import jax
import jax.numpy as jnp
from jax import lax
from jax.experimental import pallas as pl
from jax.experimental.pallas import tpu as pltpu


# ----------------------------------------------------------------------------- config
NUM_CHANNELS = 16          # latent dim
NUM_HID_CHANNELS = 32
NUM_LAYERS = 3
SKIP_LAYERS = (1,)
NUM_TIME_EMB_CHANNELS = 64
CONDITION_BIAS = 1.0       # MLPSkipNet default
LN_EPS = 1e-5
MAX_PERIOD = 10000.0
_MAX_BLOCK_B = 1024        # batch tile (multiple of 8); full batch if B <= this


# ----------------------------------------------------------------------------- fused kernel
def _fused_forward_kernel(
    # batch-tiled inputs
    t_ref, x_ref,
    # constants / weights (broadcast across the batch grid)
    freqs_ref,
    tw0c_ref, tw0s_ref, tb0_ref, tw1_ref, tb1_ref,
    wec_ref, bec_ref,
    w0_ref, b0_ref, g0_ref, beta0_ref,
    w1h_ref, w1x_ref, b1_ref, g1_ref, beta1_ref,
    w2_ref, b2_ref,
    # output
    o_ref,
):
    f32 = jnp.float32
    inv_hid = 1.0 / NUM_HID_CHANNELS

    # ---- sinusoidal timestep embedding, computed on-chip (EUP) -------------
    # temb = [cos(t*freqs) | sin(t*freqs)]; the concat is avoided by splitting
    # the first time-embed weight by rows: temb @ W0 = cos@W0[:half] + sin@W0[half:]
    args = t_ref[...].astype(f32) * freqs_ref[...]          # (TB, half)
    cos_e = jnp.cos(args)
    sin_e = jnp.sin(args)

    # ---- time-embed MLP: Linear(64->C) -> SiLU -> Linear(C->C) -------------
    h = (jnp.dot(cos_e, tw0c_ref[...], preferred_element_type=f32)
         + jnp.dot(sin_e, tw0s_ref[...], preferred_element_type=f32)
         + tb0_ref[...])
    h = h * jax.nn.sigmoid(h)                                # SiLU
    cond = jnp.dot(h, tw1_ref[...], preferred_element_type=f32) + tb1_ref[...]

    # ---- shared cond path: SiLU(cond) once, one fused linear_emb matmul ----
    sc = cond * jax.nn.sigmoid(cond)
    c_all = jnp.dot(sc, wec_ref[...], preferred_element_type=f32) + bec_ref[...]
    c0 = c_all[:, :NUM_HID_CHANNELS]                         # layer-0 modulation
    c1 = c_all[:, NUM_HID_CHANNELS:]                         # layer-1 modulation

    def ln_silu(y, g, beta):
        mu = jnp.sum(y, axis=-1, keepdims=True) * inv_hid
        d = y - mu
        var = jnp.sum(d * d, axis=-1, keepdims=True) * inv_hid
        y = d * lax.rsqrt(var + LN_EPS)
        y = y * g + beta
        return y * jax.nn.sigmoid(y)                         # SiLU

    x = x_ref[...].astype(f32)

    # ---- layer 0: Linear(16->32) -> *(1+c) -> LayerNorm -> SiLU -------------
    h0 = jnp.dot(x, w0_ref[...], preferred_element_type=f32) + b0_ref[...]
    h0 = h0 * (CONDITION_BIAS + c0)
    h0 = ln_silu(h0, g0_ref[...], beta0_ref[...])

    # ---- layer 1 (skip): Linear(48->32) as split-weight matmul --------------
    h1 = (jnp.dot(h0, w1h_ref[...], preferred_element_type=f32)
          + jnp.dot(x, w1x_ref[...], preferred_element_type=f32)
          + b1_ref[...])
    h1 = h1 * (CONDITION_BIAS + c1)
    h1 = ln_silu(h1, g1_ref[...], beta1_ref[...])

    # ---- layer 2: Linear(32->16), no cond / norm / act ----------------------
    out = jnp.dot(h1, w2_ref[...], preferred_element_type=f32) + b2_ref[...]
    o_ref[...] = out.astype(o_ref.dtype)


# ----------------------------------------------------------------------------- wrapper
def mlp_skip_net_forward(fused, x, t):
    """Fused forward.  `fused` is the output of prepare_fused_params()."""
    B = x.shape[0]
    C = NUM_CHANNELS
    half = NUM_TIME_EMB_CHANNELS // 2

    block_b = B if B <= _MAX_BLOCK_B else _MAX_BLOCK_B       # full batch or mult-of-8 tile
    grid = (pl.cdiv(B, block_b),)

    t2d = t.astype(jnp.float32).reshape(B, 1)
    freqs = jnp.exp(
        -math.log(MAX_PERIOD) * jnp.arange(half, dtype=jnp.float32) / half
    ).reshape(1, half)

    def bspec(F):   # batch-tiled block
        return pl.BlockSpec((block_b, F), lambda i: (i, 0))

    def fspec(a):   # broadcast (weights / constants): same full block every step
        return pl.BlockSpec(a.shape, lambda i: (0,) * a.ndim)

    weight_args = (
        fused['tw0c'], fused['tw0s'], fused['tb0'], fused['tw1'], fused['tb1'],
        fused['we_cat'], fused['be_cat'],
        fused['w0'], fused['b0'], fused['g0'], fused['beta0'],
        fused['w1h'], fused['w1x'], fused['b1'], fused['g1'], fused['beta1'],
        fused['w2'], fused['b2'],
    )

    return pl.pallas_call(
        _fused_forward_kernel,
        out_shape=jax.ShapeDtypeStruct((B, C), x.dtype),
        grid=grid,
        in_specs=[bspec(1), bspec(C), fspec(freqs)] + [fspec(a) for a in weight_args],
        out_specs=bspec(C),
        compiler_params=pltpu.CompilerParams(dimension_semantics=("parallel",)),
    )(t2d, x, freqs, *weight_args)


# ----------------------------------------------------------------------------- params
def _linear_params(key, fan_in, fan_out, kaiming=True):
    kw, kb = jax.random.split(key)
    std = math.sqrt(2.0 / fan_in) if kaiming else 1.0 / math.sqrt(fan_in)
    w = jax.random.normal(kw, (fan_in, fan_out), jnp.float32) * std
    bound = 1.0 / math.sqrt(fan_in)
    b = jax.random.uniform(kb, (1, fan_out), jnp.float32, minval=-bound, maxval=bound)
    return w, b


def init_params(key):
    keys = jax.random.split(key, 16)
    params = {}
    # time embed: Linear(64 -> C) -> SiLU -> Linear(C -> C)   (time_last_act=False)
    params['t_w0'], params['t_b0'] = _linear_params(keys[0], NUM_TIME_EMB_CHANNELS, NUM_CHANNELS)
    params['t_w1'], params['t_b1'] = _linear_params(keys[1], NUM_CHANNELS, NUM_CHANNELS)

    layers = []
    for i in range(NUM_LAYERS):
        if i == 0:
            a, b_ = NUM_CHANNELS, NUM_HID_CHANNELS
            use_cond, norm, act, kaiming = True, True, 'silu', True
        elif i == NUM_LAYERS - 1:
            a, b_ = NUM_HID_CHANNELS, NUM_CHANNELS
            use_cond, norm, act, kaiming = False, False, 'none', False
        else:
            a, b_ = NUM_HID_CHANNELS, NUM_HID_CHANNELS
            use_cond, norm, act, kaiming = True, True, 'silu', True
        if i in SKIP_LAYERS:
            a += NUM_CHANNELS
        k0, k1 = jax.random.split(keys[2 + i])
        w, b = _linear_params(k0, a, b_, kaiming=kaiming)
        lp = dict(w=w, b=b, use_cond=use_cond, norm=norm, act=act)
        if use_cond:
            lp['we'], lp['be'] = _linear_params(k1, NUM_CHANNELS, b_, kaiming=kaiming)
        if norm:
            lp['gamma'] = jnp.ones((1, b_), jnp.float32)
            lp['beta'] = jnp.zeros((1, b_), jnp.float32)
        layers.append(lp)
    params['layers'] = layers
    return params


def prepare_fused_params(params):
    """One-time transform of the torch-style params into kernel-friendly layout:
    pre-transposed weights are split (time w0 by cos/sin half, skip layer w by
    [h | x] rows) and the two cond linear_emb weights are concatenated so the
    kernel does a single cond matmul."""
    L = params['layers']
    half_t = NUM_TIME_EMB_CHANNELS // 2
    tw0 = params['t_w0']
    w1 = L[1]['w']
    return dict(
        tw0c=tw0[:half_t], tw0s=tw0[half_t:],
        tb0=params['t_b0'], tw1=params['t_w1'], tb1=params['t_b1'],
        we_cat=jnp.concatenate([L[0]['we'], L[1]['we']], axis=1),   # (C, 2*hid)
        be_cat=jnp.concatenate([L[0]['be'], L[1]['be']], axis=1),   # (1, 2*hid)
        w0=L[0]['w'], b0=L[0]['b'], g0=L[0]['gamma'], beta0=L[0]['beta'],
        w1h=w1[:NUM_HID_CHANNELS], w1x=w1[NUM_HID_CHANNELS:], b1=L[1]['b'],
        g1=L[1]['gamma'], beta1=L[1]['beta'],
        w2=L[2]['w'], b2=L[2]['b'],
    )


# ----------------------------------------------------------------------------- pure-JAX reference
def timestep_embedding(t, dim, max_period=MAX_PERIOD):
    half = dim // 2
    freqs = jnp.exp(-math.log(max_period) * jnp.arange(half, dtype=jnp.float32) / half)
    args = t.astype(jnp.float32)[:, None] * freqs[None, :]
    return jnp.concatenate([jnp.cos(args), jnp.sin(args)], axis=-1)


def _reference_forward(params, x, t):
    temb = timestep_embedding(t, NUM_TIME_EMB_CHANNELS)
    h = temb @ params['t_w0'] + params['t_b0']
    h = h * jax.nn.sigmoid(h)
    cond = h @ params['t_w1'] + params['t_b1']
    h = x
    for i, lp in enumerate(params['layers']):
        if i in SKIP_LAYERS:
            h = jnp.concatenate([h, x], axis=1)
        y = h @ lp['w'] + lp['b']
        if lp['use_cond']:
            c = cond * jax.nn.sigmoid(cond)
            c = c @ lp['we'] + lp['be']
            y = y * (CONDITION_BIAS + c)
        if lp['norm']:
            mu = jnp.mean(y, axis=-1, keepdims=True)
            var = jnp.mean((y - mu) ** 2, axis=-1, keepdims=True)
            y = (y - mu) / jnp.sqrt(var + LN_EPS)
            y = y * lp['gamma'] + lp['beta']
        if lp['act'] == 'silu':
            y = y * jax.nn.sigmoid(y)
        h = y
    return h  # last_act = 'none'


# ----------------------------------------------------------------------------- main
if __name__ == "__main__":
    key = jax.random.PRNGKey(0)
    k_param, k_x, k_t = jax.random.split(key, 3)

    params = init_params(k_param)
    fused = prepare_fused_params(params)

    batch = 2
    x = jax.random.normal(k_x, (batch, NUM_CHANNELS), jnp.float32)
    t = jax.random.uniform(k_t, (batch,), jnp.float32, minval=0.0, maxval=1000.0)

    fwd = jax.jit(mlp_skip_net_forward)
    out = jax.block_until_ready(fwd(fused, x, t))

    ref = _reference_forward(params, x, t)
    assert out.shape == (batch, NUM_CHANNELS), out.shape
    assert jnp.all(jnp.isfinite(out))
    assert jnp.allclose(out, ref, atol=1e-4, rtol=1e-4), float(jnp.max(jnp.abs(out - ref)))
    print("KERNEL_OK")
</pallas_src>

<mosaic_0001>
module attributes {stable_mosaic.version = 11 : i64} {
  func.func @_fused_forward_kernel(%arg0: i32, %arg1: memref<2x1xf32, #tpu.memory_space<vmem>>, %arg2: memref<2x16xf32, #tpu.memory_space<vmem>>, %arg3: memref<1x32xf32, #tpu.memory_space<vmem>>, %arg4: memref<32x16xf32, #tpu.memory_space<vmem>>, %arg5: memref<32x16xf32, #tpu.memory_space<vmem>>, %arg6: memref<1x16xf32, #tpu.memory_space<vmem>>, %arg7: memref<16x16xf32, #tpu.memory_space<vmem>>, %arg8: memref<1x16xf32, #tpu.memory_space<vmem>>, %arg9: memref<16x64xf32, #tpu.memory_space<vmem>>, %arg10: memref<1x64xf32, #tpu.memory_space<vmem>>, %arg11: memref<16x32xf32, #tpu.memory_space<vmem>>, %arg12: memref<1x32xf32, #tpu.memory_space<vmem>>, %arg13: memref<1x32xf32, #tpu.memory_space<vmem>>, %arg14: memref<1x32xf32, #tpu.memory_space<vmem>>, %arg15: memref<32x32xf32, #tpu.memory_space<vmem>>, %arg16: memref<16x32xf32, #tpu.memory_space<vmem>>, %arg17: memref<1x32xf32, #tpu.memory_space<vmem>>, %arg18: memref<1x32xf32, #tpu.memory_space<vmem>>, %arg19: memref<1x32xf32, #tpu.memory_space<vmem>>, %arg20: memref<32x16xf32, #tpu.memory_space<vmem>>, %arg21: memref<1x16xf32, #tpu.memory_space<vmem>>, %arg22: memref<2x16xf32, #tpu.memory_space<vmem>>) attributes {dimension_semantics = [#tpu.dimension_semantics<parallel>], iteration_bounds = array<i64: 1>, scalar_prefetch = 0 : i64, scratch_operands = 0 : i64, tpu.core_type = #tpu.core_type<tc>, window_params = [{transform_indices = @transform_0, window_bounds = array<i64: 2, 1>}, {transform_indices = @transform_1, window_bounds = array<i64: 2, 16>}, {pipeline_mode = #tpu.pipeline_mode<synchronous>, transform_indices = @transform_2, window_bounds = array<i64: 1, 32>}, {pipeline_mode = #tpu.pipeline_mode<synchronous>, transform_indices = @transform_3, window_bounds = array<i64: 32, 16>}, {pipeline_mode = #tpu.pipeline_mode<synchronous>, transform_indices = @transform_4, window_bounds = array<i64: 32, 16>}, {pipeline_mode = #tpu.pipeline_mode<synchronous>, transform_indices = @transform_5, window_bounds = array<i64: 1, 16>}, {pipeline_mode = #tpu.pipeline_mode<synchronous>, transform_indices = @transform_6, window_bounds = array<i64: 16, 16>}, {pipeline_mode = #tpu.pipeline_mode<synchronous>, transform_indices = @transform_7, window_bounds = array<i64: 1, 16>}, {pipeline_mode = #tpu.pipeline_mode<synchronous>, transform_indices = @transform_8, window_bounds = array<i64: 16, 64>}, {pipeline_mode = #tpu.pipeline_mode<synchronous>, transform_indices = @transform_9, window_bounds = array<i64: 1, 64>}, {pipeline_mode = #tpu.pipeline_mode<synchronous>, transform_indices = @transform_10, window_bounds = array<i64: 16, 32>}, {pipeline_mode = #tpu.pipeline_mode<synchronous>, transform_indices = @transform_11, window_bounds = array<i64: 1, 32>}, {pipeline_mode = #tpu.pipeline_mode<synchronous>, transform_indices = @transform_12, window_bounds = array<i64: 1, 32>}, {pipeline_mode = #tpu.pipeline_mode<synchronous>, transform_indices = @transform_13, window_bounds = array<i64: 1, 32>}, {pipeline_mode = #tpu.pipeline_mode<synchronous>, transform_indices = @transform_14, window_bounds = array<i64: 32, 32>}, {pipeline_mode = #tpu.pipeline_mode<synchronous>, transform_indices = @transform_15, window_bounds = array<i64: 16, 32>}, {pipeline_mode = #tpu.pipeline_mode<synchronous>, transform_indices = @transform_16, window_bounds = array<i64: 1, 32>}, {pipeline_mode = #tpu.pipeline_mode<synchronous>, transform_indices = @transform_17, window_bounds = array<i64: 1, 32>}, {pipeline_mode = #tpu.pipeline_mode<synchronous>, transform_indices = @transform_18, window_bounds = array<i64: 1, 32>}, {pipeline_mode = #tpu.pipeline_mode<synchronous>, transform_indices = @transform_19, window_bounds = array<i64: 32, 16>}, {pipeline_mode = #tpu.pipeline_mode<synchronous>, transform_indices = @transform_20, window_bounds = array<i64: 1, 16>}, {transform_indices = @transform_21, window_bounds = array<i64: 2, 16>}]} {
    %c0 = arith.constant 0 : index
    %c0_0 = arith.constant 0 : index
    %0 = vector.load %arg1[%c0, %c0_0] : memref<2x1xf32, #tpu.memory_space<vmem>>, vector<2x1xf32>
    %c0_1 = arith.constant 0 : index
    %c0_2 = arith.constant 0 : index
    %1 = vector.load %arg3[%c0_1, %c0_2] : memref<1x32xf32, #tpu.memory_space<vmem>>, vector<1x32xf32>
    %2 = vector.broadcast %0 : vector<2x1xf32> to vector<2x32xf32>
    %3 = vector.broadcast %1 : vector<1x32xf32> to vector<2x32xf32>
    %4 = arith.mulf %2, %3 : vector<2x32xf32>
    %5 = math.cos %4 : vector<2x32xf32>
    %6 = math.sin %4 : vector<2x32xf32>
    %c0_3 = arith.constant 0 : index
    %c0_4 = arith.constant 0 : index
    %7 = vector.load %arg4[%c0_3, %c0_4] : memref<32x16xf32, #tpu.memory_space<vmem>>, vector<32x16xf32>
    %cst = arith.constant dense<0.000000e+00> : vector<2x16xf32>
    %8 = tpu.matmul %5, %7, %cst {dimension_numbers = #tpu.dot_dimension_numbers<[1], [0], [0], [1], [0, 0, 1, 1], [], []>} : vector<2x32xf32>, vector<32x16xf32>, vector<2x16xf32> -> vector<2x16xf32>
    %c0_5 = arith.constant 0 : index
    %c0_6 = arith.constant 0 : index
    %9 = vector.load %arg5[%c0_5, %c0_6] : memref<32x16xf32, #tpu.memory_space<vmem>>, vector<32x16xf32>
    %cst_7 = arith.constant dense<0.000000e+00> : vector<2x16xf32>
    %10 = tpu.matmul %6, %9, %cst_7 {dimension_numbers = #tpu.dot_dimension_numbers<[1], [0], [0], [1], [0, 0, 1, 1], [], []>} : vector<2x32xf32>, vector<32x16xf32>, vector<2x16xf32> -> vector<2x16xf32>
    %11 = arith.addf %8, %10 : vector<2x16xf32>
    %c0_8 = arith.constant 0 : index
    %c0_9 = arith.constant 0 : index
    %12 = vector.load %arg6[%c0_8, %c0_9] : memref<1x16xf32, #tpu.memory_space<vmem>>, vector<1x16xf32>
    %13 = vector.broadcast %12 : vector<1x16xf32> to vector<2x16xf32>
    %14 = arith.addf %11, %13 : vector<2x16xf32>
    %15 = arith.negf %14 : vector<2x16xf32>
    %16 = math.exp %15 : vector<2x16xf32>
    %cst_10 = arith.constant 1.000000e+00 : f32
    %17 = vector.broadcast %cst_10 : f32 to vector<2x16xf32>
    %18 = arith.addf %17, %16 : vector<2x16xf32>
    %19 = arith.divf %17, %18 : vector<2x16xf32>
    %20 = arith.mulf %14, %19 : vector<2x16xf32>
    %c0_11 = arith.constant 0 : index
    %c0_12 = arith.constant 0 : index
    %21 = vector.load %arg7[%c0_11, %c0_12] : memref<16x16xf32, #tpu.memory_space<vmem>>, vector<16x16xf32>
    %cst_13 = arith.constant dense<0.000000e+00> : vector<2x16xf32>
    %22 = tpu.matmul %20, %21, %cst_13 {dimension_numbers = #tpu.dot_dimension_numbers<[1], [0], [0], [1], [0, 0, 1, 1], [], []>} : vector<2x16xf32>, vector<16x16xf32>, vector<2x16xf32> -> vector<2x16xf32>
    %c0_14 = arith.constant 0 : index
    %c0_15 = arith.constant 0 : index
    %23 = vector.load %arg8[%c0_14, %c0_15] : memref<1x16xf32, #tpu.memory_space<vmem>>, vector<1x16xf32>
    %24 = vector.broadcast %23 : vector<1x16xf32> to vector<2x16xf32>
    %25 = arith.addf %22, %24 : vector<2x16xf32>
    %26 = arith.negf %25 : vector<2x16xf32>
    %27 = math.exp %26 : vector<2x16xf32>
    %cst_16 = arith.constant 1.000000e+00 : f32
    %28 = vector.broadcast %cst_16 : f32 to vector<2x16xf32>
    %29 = arith.addf %28, %27 : vector<2x16xf32>
    %30 = arith.divf %28, %29 : vector<2x16xf32>
    %31 = arith.mulf %25, %30 : vector<2x16xf32>
    %c0_17 = arith.constant 0 : index
    %c0_18 = arith.constant 0 : index
    %32 = vector.load %arg9[%c0_17, %c0_18] : memref<16x64xf32, #tpu.memory_space<vmem>>, vector<16x64xf32>
    %cst_19 = arith.constant dense<0.000000e+00> : vector<2x64xf32>
    %33 = tpu.matmul %31, %32, %cst_19 {dimension_numbers = #tpu.dot_dimension_numbers<[1], [0], [0], [1], [0, 0, 1, 1], [], []>} : vector<2x16xf32>, vector<16x64xf32>, vector<2x64xf32> -> vector<2x64xf32>
    %c0_20 = arith.constant 0 : index
    %c0_21 = arith.constant 0 : index
    %34 = vector.load %arg10[%c0_20, %c0_21] : memref<1x64xf32, #tpu.memory_space<vmem>>, vector<1x64xf32>
    %35 = vector.broadcast %34 : vector<1x64xf32> to vector<2x64xf32>
    %36 = arith.addf %33, %35 : vector<2x64xf32>
    %37 = vector.extract_strided_slice %36 {offsets = [0, 0], sizes = [2, 32], strides = [1, 1]} : vector<2x64xf32> to vector<2x32xf32>
    %38 = vector.extract_strided_slice %36 {offsets = [0, 32], sizes = [2, 32], strides = [1, 1]} : vector<2x64xf32> to vector<2x32xf32>
    %c0_22 = arith.constant 0 : index
    %c0_23 = arith.constant 0 : index
    %39 = vector.load %arg2[%c0_22, %c0_23] : memref<2x16xf32, #tpu.memory_space<vmem>>, vector<2x16xf32>
    %c0_24 = arith.constant 0 : index
    %c0_25 = arith.constant 0 : index
    %40 = vector.load %arg11[%c0_24, %c0_25] : memref<16x32xf32, #tpu.memory_space<vmem>>, vector<16x32xf32>
    %cst_26 = arith.constant dense<0.000000e+00> : vector<2x32xf32>
    %41 = tpu.matmul %39, %40, %cst_26 {dimension_numbers = #tpu.dot_dimension_numbers<[1], [0], [0], [1], [0, 0, 1, 1], [], []>} : vector<2x16xf32>, vector<16x32xf32>, vector<2x32xf32> -> vector<2x32xf32>
    %c0_27 = arith.constant 0 : index
    %c0_28 = arith.constant 0 : index
    %42 = vector.load %arg12[%c0_27, %c0_28] : memref<1x32xf32, #tpu.memory_space<vmem>>, vector<1x32xf32>
    %43 = vector.broadcast %42 : vector<1x32xf32> to vector<2x32xf32>
    %44 = arith.addf %41, %43 : vector<2x32xf32>
    %cst_29 = arith.constant 1.000000e+00 : f32
    %45 = vector.broadcast %cst_29 : f32 to vector<2x32xf32>
    %46 = arith.addf %45, %37 : vector<2x32xf32>
    %47 = arith.mulf %44, %46 : vector<2x32xf32>
    %c0_30 = arith.constant 0 : index
    %c0_31 = arith.constant 0 : index
    %48 = vector.load %arg13[%c0_30, %c0_31] : memref<1x32xf32, #tpu.memory_space<vmem>>, vector<1x32xf32>
    %c0_32 = arith.constant 0 : index
    %c0_33 = arith.constant 0 : index
    %49 = vector.load %arg14[%c0_32, %c0_33] : memref<1x32xf32, #tpu.memory_space<vmem>>, vector<1x32xf32>
    %cst_34 = arith.constant dense<0.000000e+00> : vector<2xf32>
    %50 = vector.multi_reduction <add>, %47, %cst_34 [1] : vector<2x32xf32> to vector<2xf32>
    %51 = vector.shape_cast %50 : vector<2xf32> to vector<2x1xf32>
    %cst_35 = arith.constant 3.125000e-02 : f32
    %52 = vector.broadcast %cst_35 : f32 to vector<2x1xf32>
    %53 = arith.mulf %51, %52 : vector<2x1xf32>
    %54 = vector.broadcast %53 : vector<2x1xf32> to vector<2x32xf32>
    %55 = arith.subf %47, %54 : vector<2x32xf32>
    %56 = arith.mulf %55, %55 : vector<2x32xf32>
    %cst_36 = arith.constant dense<0.000000e+00> : vector<2xf32>
    %57 = vector.multi_reduction <add>, %56, %cst_36 [1] : vector<2x32xf32> to vector<2xf32>
    %58 = vector.shape_cast %57 : vector<2xf32> to vector<2x1xf32>
    %cst_37 = arith.constant 3.125000e-02 : f32
    %59 = vector.broadcast %cst_37 : f32 to vector<2x1xf32>
    %60 = arith.mulf %58, %59 : vector<2x1xf32>
    %cst_38 = arith.constant 9.99999974E-6 : f32
    %61 = vector.broadcast %cst_38 : f32 to vector<2x1xf32>
    %62 = arith.addf %60, %61 : vector<2x1xf32>
    %63 = math.rsqrt %62 : vector<2x1xf32>
    %64 = vector.broadcast %63 : vector<2x1xf32> to vector<2x32xf32>
    %65 = arith.mulf %55, %64 : vector<2x32xf32>
    %66 = vector.broadcast %48 : vector<1x32xf32> to vector<2x32xf32>
    %67 = arith.mulf %65, %66 : vector<2x32xf32>
    %68 = vector.broadcast %49 : vector<1x32xf32> to vector<2x32xf32>
    %69 = arith.addf %67, %68 : vector<2x32xf32>
    %70 = arith.negf %69 : vector<2x32xf32>
    %71 = math.exp %70 : vector<2x32xf32>
    %cst_39 = arith.constant 1.000000e+00 : f32
    %72 = vector.broadcast %cst_39 : f32 to vector<2x32xf32>
    %73 = arith.addf %72, %71 : vector<2x32xf32>
    %74 = arith.divf %72, %73 : vector<2x32xf32>
    %75 = arith.mulf %69, %74 : vector<2x32xf32>
    %c0_40 = arith.constant 0 : index
    %c0_41 = arith.constant 0 : index
    %76 = vector.load %arg15[%c0_40, %c0_41] : memref<32x32xf32, #tpu.memory_space<vmem>>, vector<32x32xf32>
    %cst_42 = arith.constant dense<0.000000e+00> : vector<2x32xf32>
    %77 = tpu.matmul %75, %76, %cst_42 {dimension_numbers = #tpu.dot_dimension_numbers<[1], [0], [0], [1], [0, 0, 1, 1], [], []>} : vector<2x32xf32>, vector<32x32xf32>, vector<2x32xf32> -> vector<2x32xf32>
    %c0_43 = arith.constant 0 : index
    %c0_44 = arith.constant 0 : index
    %78 = vector.load %arg16[%c0_43, %c0_44] : memref<16x32xf32, #tpu.memory_space<vmem>>, vector<16x32xf32>
    %cst_45 = arith.constant dense<0.000000e+00> : vector<2x32xf32>
    %79 = tpu.matmul %39, %78, %cst_45 {dimension_numbers = #tpu.dot_dimension_numbers<[1], [0], [0], [1], [0, 0, 1, 1], [], []>} : vector<2x16xf32>, vector<16x32xf32>, vector<2x32xf32> -> vector<2x32xf32>
    %80 = arith.addf %77, %79 : vector<2x32xf32>
    %c0_46 = arith.constant 0 : index
    %c0_47 = arith.constant 0 : index
    %81 = vector.load %arg17[%c0_46, %c0_47] : memref<1x32xf32, #tpu.memory_space<vmem>>, vector<1x32xf32>
    %82 = vector.broadcast %81 : vector<1x32xf32> to vector<2x32xf32>
    %83 = arith.addf %80, %82 : vector<2x32xf32>
    %cst_48 = arith.constant 1.000000e+00 : f32
    %84 = vector.broadcast %cst_48 : f32 to vector<2x32xf32>
    %85 = arith.addf %84, %38 : vector<2x32xf32>
    %86 = arith.mulf %83, %85 : vector<2x32xf32>
    %c0_49 = arith.constant 0 : index
    %c0_50 = arith.constant 0 : index
    %87 = vector.load %arg18[%c0_49, %c0_50] : memref<1x32xf32, #tpu.memory_space<vmem>>, vector<1x32xf32>
    %c0_51 = arith.constant 0 : index
    %c0_52 = arith.constant 0 : index
    %88 = vector.load %arg19[%c0_51, %c0_52] : memref<1x32xf32, #tpu.memory_space<vmem>>, vector<1x32xf32>
    %cst_53 = arith.constant dense<0.000000e+00> : vector<2xf32>
    %89 = vector.multi_reduction <add>, %86, %cst_53 [1] : vector<2x32xf32> to vector<2xf32>
    %90 = vector.shape_cast %89 : vector<2xf32> to vector<2x1xf32>
    %cst_54 = arith.constant 3.125000e-02 : f32
    %91 = vector.broadcast %cst_54 : f32 to vector<2x1xf32>
    %92 = arith.mulf %90, %91 : vector<2x1xf32>
    %93 = vector.broadcast %92 : vector<2x1xf32> to vector<2x32xf32>
    %94 = arith.subf %86, %93 : vector<2x32xf32>
    %95 = arith.mulf %94, %94 : vector<2x32xf32>
    %cst_55 = arith.constant dense<0.000000e+00> : vector<2xf32>
    %96 = vector.multi_reduction <add>, %95, %cst_55 [1] : vector<2x32xf32> to vector<2xf32>
    %97 = vector.shape_cast %96 : vector<2xf32> to vector<2x1xf32>
    %cst_56 = arith.constant 3.125000e-02 : f32
    %98 = vector.broadcast %cst_56 : f32 to vector<2x1xf32>
    %99 = arith.mulf %97, %98 : vector<2x1xf32>
    %cst_57 = arith.constant 9.99999974E-6 : f32
    %100 = vector.broadcast %cst_57 : f32 to vector<2x1xf32>
    %101 = arith.addf %99, %100 : vector<2x1xf32>
    %102 = math.rsqrt %101 : vector<2x1xf32>
    %103 = vector.broadcast %102 : vector<2x1xf32> to vector<2x32xf32>
    %104 = arith.mulf %94, %103 : vector<2x32xf32>
    %105 = vector.broadcast %87 : vector<1x32xf32> to vector<2x32xf32>
    %106 = arith.mulf %104, %105 : vector<2x32xf32>
    %107 = vector.broadcast %88 : vector<1x32xf32> to vector<2x32xf32>
    %108 = arith.addf %106, %107 : vector<2x32xf32>
    %109 = arith.negf %108 : vector<2x32xf32>
    %110 = math.exp %109 : vector<2x32xf32>
    %cst_58 = arith.constant 1.000000e+00 : f32
    %111 = vector.broadcast %cst_58 : f32 to vector<2x32xf32>
    %112 = arith.addf %111, %110 : vector<2x32xf32>
    %113 = arith.divf %111, %112 : vector<2x32xf32>
    %114 = arith.mulf %108, %113 : vector<2x32xf32>
    %c0_59 = arith.constant 0 : index
    %c0_60 = arith.constant 0 : index
    %115 = vector.load %arg20[%c0_59, %c0_60] : memref<32x16xf32, #tpu.memory_space<vmem>>, vector<32x16xf32>
    %cst_61 = arith.constant dense<0.000000e+00> : vector<2x16xf32>
    %116 = tpu.matmul %114, %115, %cst_61 {dimension_numbers = #tpu.dot_dimension_numbers<[1], [0], [0], [1], [0, 0, 1, 1], [], []>} : vector<2x32xf32>, vector<32x16xf32>, vector<2x16xf32> -> vector<2x16xf32>
    %c0_62 = arith.constant 0 : index
    %c0_63 = arith.constant 0 : index
    %117 = vector.load %arg21[%c0_62, %c0_63] : memref<1x16xf32, #tpu.memory_space<vmem>>, vector<1x16xf32>
    %118 = vector.broadcast %117 : vector<1x16xf32> to vector<2x16xf32>
    %119 = arith.addf %116, %118 : vector<2x16xf32>
    %c0_64 = arith.constant 0 : index
    %c0_65 = arith.constant 0 : index
    %120 = vector.load %arg22[%c0_64, %c0_65] : memref<2x16xf32, #tpu.memory_space<vmem>>, vector<2x16xf32>
    tpu.vector_store %arg22[%c0_64, %c0_65], %119 {strides = array<i32>} : memref<2x16xf32, #tpu.memory_space<vmem>>, vector<2x16xf32>,
    return
  }
  func.func @transform_0(%arg0: i32) -> (i32, i32) {
    %c0_i32 = arith.constant 0 : i32
    %c0_i32_0 = arith.constant 0 : i32
    return %arg0, %c0_i32 : i32, i32
  }
  func.func @transform_1(%arg0: i32) -> (i32, i32) {
    %c0_i32 = arith.constant 0 : i32
    %c0_i32_0 = arith.constant 0 : i32
    return %arg0, %c0_i32 : i32, i32
  }
  func.func @transform_2(%arg0: i32) -> (i32, i32) {
    %c0_i32 = arith.constant 0 : i32
    %c0_i32_0 = arith.constant 0 : i32
    %c0_i32_1 = arith.constant 0 : i32
    return %c0_i32, %c0_i32_0 : i32, i32
  }
  func.func @transform_3(%arg0: i32) -> (i32, i32) {
    %c0_i32 = arith.constant 0 : i32
    %c0_i32_0 = arith.constant 0 : i32
    %c0_i32_1 = arith.constant 0 : i32
    return %c0_i32, %c0_i32_0 : i32, i32
  }
  func.func @transform_4(%arg0: i32) -> (i32, i32) {
    %c0_i32 = arith.constant 0 : i32
    %c0_i32_0 = arith.constant 0 : i32
    %c0_i32_1 = arith.constant 0 : i32
    return %c0_i32, %c0_i32_0 : i32, i32
  }
  func.func @transform_5(%arg0: i32) -> (i32, i32) {
    %c0_i32 = arith.constant 0 : i32
    %c0_i32_0 = arith.constant 0 : i32
    %c0_i32_1 = arith.constant 0 : i32
    return %c0_i32, %c0_i32_0 : i32, i32
  }
  func.func @transform_6(%arg0: i32) -> (i32, i32) {
    %c0_i32 = arith.constant 0 : i32
    %c0_i32_0 = arith.constant 0 : i32
    %c0_i32_1 = arith.constant 0 : i32
    return %c0_i32, %c0_i32_0 : i32, i32
  }
  func.func @transform_7(%arg0: i32) -> (i32, i32) {
    %c0_i32 = arith.constant 0 : i32
    %c0_i32_0 = arith.constant 0 : i32
    %c0_i32_1 = arith.constant 0 : i32
    return %c0_i32, %c0_i32_0 : i32, i32
  }
  func.func @transform_8(%arg0: i32) -> (i32, i32) {
    %c0_i32 = arith.constant 0 : i32
    %c0_i32_0 = arith.constant 0 : i32
    %c0_i32_1 = arith.constant 0 : i32
    return %c0_i32, %c0_i32_0 : i32, i32
  }
  func.func @transform_9(%arg0: i32) -> (i32, i32) {
    %c0_i32 = arith.constant 0 : i32
    %c0_i32_0 = arith.constant 0 : i32
    %c0_i32_1 = arith.constant 0 : i32
    return %c0_i32, %c0_i32_0 : i32, i32
  }
  func.func @transform_10(%arg0: i32) -> (i32, i32) {
    %c0_i32 = arith.constant 0 : i32
    %c0_i32_0 = arith.constant 0 : i32
    %c0_i32_1 = arith.constant 0 : i32
    return %c0_i32, %c0_i32_0 : i32, i32
  }
  func.func @transform_11(%arg0: i32) -> (i32, i32) {
    %c0_i32 = arith.constant 0 : i32
    %c0_i32_0 = arith.constant 0 : i32
    %c0_i32_1 = arith.constant 0 : i32
    return %c0_i32, %c0_i32_0 : i32, i32
  }
  func.func @transform_12(%arg0: i32) -> (i32, i32) {
    %c0_i32 = arith.constant 0 : i32
    %c0_i32_0 = arith.constant 0 : i32
    %c0_i32_1 = arith.constant 0 : i32
    return %c0_i32, %c0_i32_0 : i32, i32
  }
  func.func @transform_13(%arg0: i32) -> (i32, i32) {
    %c0_i32 = arith.constant 0 : i32
    %c0_i32_0 = arith.constant 0 : i32
    %c0_i32_1 = arith.constant 0 : i32
    return %c0_i32, %c0_i32_0 : i32, i32
  }
  func.func @transform_14(%arg0: i32) -> (i32, i32) {
    %c0_i32 = arith.constant 0 : i32
    %c0_i32_0 = arith.constant 0 : i32
    %c0_i32_1 = arith.constant 0 : i32
    return %c0_i32, %c0_i32_0 : i32, i32
  }
  func.func @transform_15(%arg0: i32) -> (i32, i32) {
    %c0_i32 = arith.constant 0 : i32
    %c0_i32_0 = arith.constant 0 : i32
    %c0_i32_1 = arith.constant 0 : i32
    return %c0_i32, %c0_i32_0 : i32, i32
  }
  func.func @transform_16(%arg0: i32) -> (i32, i32) {
    %c0_i32 = arith.constant 0 : i32
    %c0_i32_0 = arith.constant 0 : i32
    %c0_i32_1 = arith.constant 0 : i32
    return %c0_i32, %c0_i32_0 : i32, i32
  }
  func.func @transform_17(%arg0: i32) -> (i32, i32) {
    %c0_i32 = arith.constant 0 : i32
    %c0_i32_0 = arith.constant 0 : i32
    %c0_i32_1 = arith.constant 0 : i32
    return %c0_i32, %c0_i32_0 : i32, i32
  }
  func.func @transform_18(%arg0: i32) -> (i32, i32) {
    %c0_i32 = arith.constant 0 : i32
    %c0_i32_0 = arith.constant 0 : i32
    %c0_i32_1 = arith.constant 0 : i32
    return %c0_i32, %c0_i32_0 : i32, i32
  }
  func.func @transform_19(%arg0: i32) -> (i32, i32) {
    %c0_i32 = arith.constant 0 : i32
    %c0_i32_0 = arith.constant 0 : i32
    %c0_i32_1 = arith.constant 0 : i32
    return %c0_i32, %c0_i32_0 : i32, i32
  }
  func.func @transform_20(%arg0: i32) -> (i32, i32) {
    %c0_i32 = arith.constant 0 : i32
    %c0_i32_0 = arith.constant 0 : i32
    %c0_i32_1 = arith.constant 0 : i32
    return %c0_i32, %c0_i32_0 : i32, i32
  }
  func.func @transform_21(%arg0: i32) -> (i32, i32) {
    %c0_i32 = arith.constant 0 : i32
    %c0_i32_0 = arith.constant 0 : i32
    return %arg0, %c0_i32 : i32, i32
  }
}

</mosaic_0001>

<llo_original>
// kernel: mlp_skip_net_forward.1
$region0: #{mlp_skip_net_forward.1}
  #allocation0 [shape = 'u32[]', space=smem, size = 0x4, offset = 0x4, fixed_abs, tag = 'smem constant byte address 0x4 - core index']
  #allocation1 [shape = 'u32[144,128]{1,0:T(1,128)}', space=vmem, size = 0x12000, scoped, tag = 'internal scratch']
  %s0 = inlined_call_operand.vmem [shape: f32[2,1], index: 0, kind: input, shape index: {}]
  %s1 = inlined_call_operand.vmem [shape: f32[2,16], index: 1, kind: input, shape index: {}]
  %s2 = inlined_call_operand.vmem [shape: f32[1,32], index: 2, kind: input, shape index: {}]
  %s3 = inlined_call_operand.vmem [shape: f32[32,16], index: 3, kind: input, shape index: {}]
  %s4 = inlined_call_operand.vmem [shape: f32[32,16], index: 4, kind: input, shape index: {}]
  %s5 = inlined_call_operand.vmem [shape: f32[1,16], index: 5, kind: input, shape index: {}]
  %s6 = inlined_call_operand.vmem [shape: f32[16,16], index: 6, kind: input, shape index: {}]
  %s7 = inlined_call_operand.vmem [shape: f32[1,16], index: 7, kind: input, shape index: {}]
  %s8 = inlined_call_operand.vmem [shape: f32[16,64], index: 8, kind: input, shape index: {}]
  %s9 = inlined_call_operand.vmem [shape: f32[1,64], index: 9, kind: input, shape index: {}]
  %s10 = inlined_call_operand.vmem [shape: f32[16,32], index: 10, kind: input, shape index: {}]
  %s11 = inlined_call_operand.vmem [shape: f32[1,32], index: 11, kind: input, shape index: {}]
  %s12 = inlined_call_operand.vmem [shape: f32[1,32], index: 12, kind: input, shape index: {}]
  %s13 = inlined_call_operand.vmem [shape: f32[1,32], index: 13, kind: input, shape index: {}]
  %s14 = inlined_call_operand.vmem [shape: f32[32,32], index: 14, kind: input, shape index: {}]
  %s15 = inlined_call_operand.vmem [shape: f32[16,32], index: 15, kind: input, shape index: {}]
  %s16 = inlined_call_operand.vmem [shape: f32[1,32], index: 16, kind: input, shape index: {}]
  %s17 = inlined_call_operand.vmem [shape: f32[1,32], index: 17, kind: input, shape index: {}]
  %s18 = inlined_call_operand.vmem [shape: f32[1,32], index: 18, kind: input, shape index: {}]
  %s19 = inlined_call_operand.vmem [shape: f32[32,16], index: 19, kind: input, shape index: {}]
  %s20 = inlined_call_operand.vmem [shape: f32[1,16], index: 20, kind: input, shape index: {}]
  %s21 = inlined_call_operand.hbm [shape: f32[2,16], index: 21, kind: output, shape index: {}]
  %s22 = sld [smem:[#allocation0]]
  $region94: #{mlp_skip_net_forward.1} parent=0
    _
  %s24 = ssub.s32 1, %s22
  %s25 = scalar_select 0, %s24, %s22
  $region1: #{mlp_skip_net_forward.1} parent=0
    #allocation2 [shape = 'u8[1024]{0}', space=vmem, size = 0x400, scoped, tag = 'output window, operand 0, single buffered']
    #allocation3 [shape = 's32[1]{0}', space=sflag, size = 0x4, scoped, tag = 'scoped memory for mlp_skip_net_forward.1']
    %26 = vsyncpa [#allocation3], 0
    // Predicated region
    $region2: #{mlp_skip_net_forward.1} parent=1 // pred_check
      _
    $region3: #{mlp_skip_net_forward.1} parent=1 // pred_check_branch
      %28 = sbr.rel (0) target = $region5
    $region4: #{mlp_skip_net_forward.1} parent=1 // pred_region
      _
    $region5: #{mlp_skip_net_forward.1} parent=1 // pred_fallthru
      _
    // Predicated region
    $region6: #{mlp_skip_net_forward.1} parent=1 // pred_check
      _
    $region7: #{mlp_skip_net_forward.1} parent=1 // pred_check_branch
      %30 = sbr.rel (0) target = $region9
    $region8: #{mlp_skip_net_forward.1} parent=1 // pred_region
      _
    $region9: #{mlp_skip_net_forward.1} parent=1 // pred_fallthru
      _
    // Predicated region
    $region10: #{mlp_skip_net_forward.1} parent=1 // pred_check
      _
    $region11: #{mlp_skip_net_forward.1} parent=1 // pred_check_branch
      %32 = sbr.rel (0) target = $region13
    $region12: #{mlp_skip_net_forward.1} parent=1 // pred_region
      _
    $region13: #{mlp_skip_net_forward.1} parent=1 // pred_fallthru
      _
    // Predicated region
    $region14: #{mlp_skip_net_forward.1} parent=1 // pred_check
      _
    $region15: #{mlp_skip_net_forward.1} parent=1 // pred_check_branch
      %34 = sbr.rel (0) target = $region17
    $region16: #{mlp_skip_net_forward.1} parent=1 // pred_region
      _
    $region17: #{mlp_skip_net_forward.1} parent=1 // pred_fallthru
      _
    // Predicated region
    $region18: #{mlp_skip_net_forward.1} parent=1 // pred_check
      _
    $region19: #{mlp_skip_net_forward.1} parent=1 // pred_check_branch
      %36 = sbr.rel (0) target = $region21
    $region20: #{mlp_skip_net_forward.1} parent=1 // pred_region
      _
    $region21: #{mlp_skip_net_forward.1} parent=1 // pred_fallthru
      _
    // Predicated region
    $region22: #{mlp_skip_net_forward.1} parent=1 // pred_check
      _
    $region23: #{mlp_skip_net_forward.1} parent=1 // pred_check_branch
      %38 = sbr.rel (0) target = $region25
    $region24: #{mlp_skip_net_forward.1} parent=1 // pred_region
      _
    $region25: #{mlp_skip_net_forward.1} parent=1 // pred_fallthru
      _
    // Predicated region
    $region26: #{mlp_skip_net_forward.1} parent=1 // pred_check
      _
    $region27: #{mlp_skip_net_forward.1} parent=1 // pred_check_branch
      %40 = sbr.rel (0) target = $region29
    $region28: #{mlp_skip_net_forward.1} parent=1 // pred_region
      _
    $region29: #{mlp_skip_net_forward.1} parent=1 // pred_fallthru
      _
    // Predicated region
    $region30: #{mlp_skip_net_forward.1} parent=1 // pred_check
      _
    $region31: #{mlp_skip_net_forward.1} parent=1 // pred_check_branch
      %42 = sbr.rel (0) target = $region33
    $region32: #{mlp_skip_net_forward.1} parent=1 // pred_region
      _
    $region33: #{mlp_skip_net_forward.1} parent=1 // pred_fallthru
      _
    // Predicated region
    $region34: #{mlp_skip_net_forward.1} parent=1 // pred_check
      _
    $region35: #{mlp_skip_net_forward.1} parent=1 // pred_check_branch
      %44 = sbr.rel (0) target = $region37
    $region36: #{mlp_skip_net_forward.1} parent=1 // pred_region
      _
    $region37: #{mlp_skip_net_forward.1} parent=1 // pred_fallthru
      _
    // Predicated region
    $region38: #{mlp_skip_net_forward.1} parent=1 // pred_check
      _
    $region39: #{mlp_skip_net_forward.1} parent=1 // pred_check_branch
      %46 = sbr.rel (0) target = $region41
    $region40: #{mlp_skip_net_forward.1} parent=1 // pred_region
      _
    $region41: #{mlp_skip_net_forward.1} parent=1 // pred_fallthru
      _
    // Predicated region
    $region42: #{mlp_skip_net_forward.1} parent=1 // pred_check
      _
    $region43: #{mlp_skip_net_forward.1} parent=1 // pred_check_branch
      %48 = sbr.rel (0) target = $region45
    $region44: #{mlp_skip_net_forward.1} parent=1 // pred_region
      _
    $region45: #{mlp_skip_net_forward.1} parent=1 // pred_fallthru
      _
    // Predicated region
    $region46: #{mlp_skip_net_forward.1} parent=1 // pred_check
      _
    $region47: #{mlp_skip_net_forward.1} parent=1 // pred_check_branch
      %50 = sbr.rel (0) target = $region49
    $region48: #{mlp_skip_net_forward.1} parent=1 // pred_region
      _
    $region49: #{mlp_skip_net_forward.1} parent=1 // pred_fallthru
      _
    // Predicated region
    $region50: #{mlp_skip_net_forward.1} parent=1 // pred_check
      _
    $region51: #{mlp_skip_net_forward.1} parent=1 // pred_check_branch
      %52 = sbr.rel (0) target = $region53
    $region52: #{mlp_skip_net_forward.1} parent=1 // pred_region
      _
    $region53: #{mlp_skip_net_forward.1} parent=1 // pred_fallthru
      _
    // Predicated region
    $region54: #{mlp_skip_net_forward.1} parent=1 // pred_check
      _
    $region55: #{mlp_skip_net_forward.1} parent=1 // pred_check_branch
      %54 = sbr.rel (0) target = $region57
    $region56: #{mlp_skip_net_forward.1} parent=1 // pred_region
      _
    $region57: #{mlp_skip_net_forward.1} parent=1 // pred_fallthru
      _
    // Predicated region
    $region58: #{mlp_skip_net_forward.1} parent=1 // pred_check
      _
    $region59: #{mlp_skip_net_forward.1} parent=1 // pred_check_branch
      %56 = sbr.rel (0) target = $region61
    $region60: #{mlp_skip_net_forward.1} parent=1 // pred_region
      _
    $region61: #{mlp_skip_net_forward.1} parent=1 // pred_fallthru
      _
    // Predicated region
    $region62: #{mlp_skip_net_forward.1} parent=1 // pred_check
      _
    $region63: #{mlp_skip_net_forward.1} parent=1 // pred_check_branch
      %58 = sbr.rel (0) target = $region65
    $region64: #{mlp_skip_net_forward.1} parent=1 // pred_region
      _
    $region65: #{mlp_skip_net_forward.1} parent=1 // pred_fallthru
      _
    // Predicated region
    $region66: #{mlp_skip_net_forward.1} parent=1 // pred_check
      _
    $region67: #{mlp_skip_net_forward.1} parent=1 // pred_check_branch
      %60 = sbr.rel (0) target = $region69
    $region68: #{mlp_skip_net_forward.1} parent=1 // pred_region
      _
    $region69: #{mlp_skip_net_forward.1} parent=1 // pred_fallthru
      _
    // Predicated region
    $region70: #{mlp_skip_net_forward.1} parent=1 // pred_check
      _
    $region71: #{mlp_skip_net_forward.1} parent=1 // pred_check_branch
      %62 = sbr.rel (0) target = $region73
    $region72: #{mlp_skip_net_forward.1} parent=1 // pred_region
      _
    $region73: #{mlp_skip_net_forward.1} parent=1 // pred_fallthru
      _
    // Predicated region
    $region74: #{mlp_skip_net_forward.1} parent=1 // pred_check
      _
    $region75: #{mlp_skip_net_forward.1} parent=1 // pred_check_branch
      %64 = sbr.rel (0) target = $region77
    $region76: #{mlp_skip_net_forward.1} parent=1 // pred_region
      _
    $region77: #{mlp_skip_net_forward.1} parent=1 // pred_fallthru
      _
    // Predicated region
    $region78: #{mlp_skip_net_forward.1} parent=1 // pred_check
      _
    $region79: #{mlp_skip_net_forward.1} parent=1 // pred_check_branch
      %66 = sbr.rel (0) target = $region81
    $region80: #{mlp_skip_net_forward.1} parent=1 // pred_region
      _
    $region81: #{mlp_skip_net_forward.1} parent=1 // pred_fallthru
      _
    // Predicated region
    $region82: #{mlp_skip_net_forward.1} parent=1 // pred_check
      _
    $region83: #{mlp_skip_net_forward.1} parent=1 // pred_check_branch
      %68 = sbr.rel (0) target = $region85
    $region84: #{mlp_skip_net_forward.1} parent=1 // pred_region
      _
    $region85: #{mlp_skip_net_forward.1} parent=1 // pred_fallthru
      _
    %v69 = vld [vmem:[%s0] sm:$0x3]
    %v70 = vld [vmem:[%s2] sm:$0x1]
    %72 = vset.pattern.permute.xlu0 0
    %73 = vperm.xlu0 %72, %v69
    %v74 = vpop.permute.xlu0 %73
    %v77 = vlaneseq
    %v78 = vshrl.u32 %v77, 7
    %v79 = vsub.s32 0, %v78
    %v80 = vrot.slane %v70, %v79
    %v82 = vmul.f32 %v74, %v80
    %v83 = vand.u32 2147483647, %v82
    %vm84 = vcmp.le.f32.partialorder %v83, 0.7853982
    %vm85 = vcmp.lt.s32.totalorder %v82, 0
    %v86 = vand.u32 %v82, 2139095040
    %v87 = vshrl.u32 %v86, 23
    %v88 = vsub.s32 %v87, 127
    %v89 = vand.u32 2147483647, %v82
    %v90 = vand.u32 %v89, 8388607
    %v91 = vor.u32 %v90, 8388608
    %v92 = vsub.s32 0, %v91
    %v93 = vadd.s32 %v88, 1
    %vm94 = vcmp.gt.s32.totalorder %v93, 0
    %v95 = vsel %vm94, %v93, 0
    %v96 = vshrl.u32 %v95, 5
    %v97 = vand.u32 %v95, 31
    %v98 = vsub.s32 32, %v97
    %v99 = vshrl.u32 683565275, %v98
    %v100 = vshll.u32 683565275, %v97
    %v101 = vshrl.u32 2475754826, %v98
    %v102 = vor.u32 %v100, %v101
    %v103 = vshll.u32 2475754826, %v97
    %v104 = vshrl.u32 2131351028, %v98
    %v105 = vor.u32 %v103, %v104
    %v106 = vshll.u32 2131351028, %v97
    %v107 = vshrl.u32 2102212464, %v98
    %v108 = vor.u32 %v106, %v107
    %v109 = vshll.u32 2102212464, %v97
    %v110 = vshrl.u32 920167782, %v98
    %v111 = vor.u32 %v109, %v110
    %v112 = vshll.u32 920167782, %v97
    %v113 = vshrl.u32 1326507024, %v98
    %v114 = vor.u32 %v112, %v113
    %vm115 = vcmp.lt.s32.totalorder %v96, 1
    %vm116 = vcmp.lt.s32.totalorder %v96, 2
    %vm117 = vcmp.lt.s32.totalorder %v96, 3
    %vm118 = vcmp.lt.s32.totalorder %v96, 4
    %v119 = vsel %vm115, %v99, %v102
    %v120 = vsel %vm118, %v108, 2102212464
    %v121 = vsel %vm117, %v105, %v120
    %v122 = vsel %vm116, %v119, %v121
    %v123 = vsel %vm115, %v102, %v105
    %v124 = vsel %vm118, %v111, 920167782
    %v125 = vsel %vm117, %v108, %v124
    %v126 = vsel %vm116, %v123, %v125
    %v127 = vsel %vm115, %v105, %v108
    %v128 = vsel %vm118, %v114, 1326507024
    %v129 = vsel %vm117, %v111, %v128
    %v130 = vsel %vm116, %v127, %v129
    %v131 = vshll.u32 %v91, 8
    %v132 = vmul.u32.u64.compose %v131, %v130
    %v133 = vextract.low.u32 %v132
    %v134 = vextract.high.u32 %v132
    %v135 = vmul.u32.u64.compose %v131, %v126
    %v136 = vextract.low.u32 %v135
    %v137 = vextract.high.u32 %v135
    %v138 = vmul.u32 %v131, %v122
    %v139 = vadd.s32 %v134, %v136
    %vm140 = vc.u32 %v134, %v136
    %v141 = vadd.s32 %v137, 1
    %v142 = vsel %vm140, %v141, %v137
    %v143 = vadd.s32 %v138, %v142
    %v144 = vadd.s32 %v143, 536870912
    %v145 = vshrl.u32 %v144, 30
    %v146 = vshll.u32 %v145, 30
    %v147 = vsub.s32 %v143, %v146
    %vm148 = vcmp.lt.s32.totalorder %v147, 0
    %v149 = vsub.s32 0, %v147
    %v150 = vsel %vm148, %v149, %v147
    %v151 = vclz %v150
    %v152 = vsub.s32 %v151, 2
    %vm153 = vcmp.gt.s32.totalorder 0, %v152
    %v154 = vsel %vm153, 0, %v152
    %v155 = vsub.s32 32, %v154
    %v156 = vshll.u32 %v147, %v154
    %v157 = vshrl.u32 %v139, %v155
    %v158 = vor.u32 %v156, %v157
    %v159 = vsub.s32 4294967266, %v154
    %v160 = vadd.s32 %v159, 127
    %v161 = vshll.u32 %v160, 23
    %v162 = vor.u32 4788187, %v161
    %v163 = vand.u32 2147483647, %v162
    %v165 = vcvt.s32.f32 %v158
    %v166 = vmul.f32 %v165, %v163
    %v167 = vxor.u32 %v166, 2147483648
    %v168 = vsel %vm85, %v167, %v166
    %v169 = vsub.s32 4, %v145
    %v170 = vsel %vm85, %v169, %v145
    %v171 = vsel %vm84, %v82, %v168
    %v172 = vsel %vm84, 0, %v170
    %v173 = vcosq.f32.pop %v171
    %v174 = vsinq.f32.pop %v171
    %vm175 = vweird.f32 %v82
    %v176 = vand.u32 %v172, 3
    %vm177 = vcmp.lt.s32.totalorder %v176, 2
    %vm178 = vcmp.eq.s32.totalorder %v176, 0
    %v179 = vxor.u32 %v174, 2147483648
    %v180 = vsel %vm178, %v173, %v179
    %vm181 = vcmp.eq.s32.totalorder %v176, 2
    %v182 = vxor.u32 %v173, 2147483648
    %v183 = vsel %vm181, %v182, %v174
    %v184 = vsel %vm177, %v180, %v183
    %v185 = vsel %vm175, nan, %v184
    %v186 = vand.u32 2147483647, %v82
    %vm187 = vcmp.le.f32.partialorder %v186, 0.7853982
    %vm188 = vcmp.lt.s32.totalorder %v82, 0
    %v189 = vand.u32 %v82, 2139095040
    %v190 = vshrl.u32 %v189, 23
    %v191 = vsub.s32 %v190, 127
    %v192 = vand.u32 2147483647, %v82
    %v193 = vand.u32 %v192, 8388607
    %v194 = vor.u32 %v193, 8388608
    %v195 = vsub.s32 0, %v194
    %v196 = vadd.s32 %v191, 1
    %vm197 = vcmp.gt.s32.totalorder %v196, 0
    %v198 = vsel %vm197, %v196, 0
    %v199 = vshrl.u32 %v198, 5
    %v200 = vand.u32 %v198, 31
    %v201 = vsub.s32 32, %v200
    %v202 = vshrl.u32 683565275, %v201
    %v203 = vshll.u32 683565275, %v200
    %v204 = vshrl.u32 2475754826, %v201
    %v205 = vor.u32 %v203, %v204
    %v206 = vshll.u32 2475754826, %v200
    %v207 = vshrl.u32 2131351028, %v201
    %v208 = vor.u32 %v206, %v207
    %v209 = vshll.u32 2131351028, %v200
    %v210 = vshrl.u32 2102212464, %v201
    %v211 = vor.u32 %v209, %v210
    %v212 = vshll.u32 2102212464, %v200
    %v213 = vshrl.u32 920167782, %v201
    %v214 = vor.u32 %v212, %v213
    %v215 = vshll.u32 920167782, %v200
    %v216 = vshrl.u32 1326507024, %v201
    %v217 = vor.u32 %v215, %v216
    %vm218 = vcmp.lt.s32.totalorder %v199, 1
    %vm219 = vcmp.lt.s32.totalorder %v199, 2
    %vm220 = vcmp.lt.s32.totalorder %v199, 3
    %vm221 = vcmp.lt.s32.totalorder %v199, 4
    %v222 = vsel %vm218, %v202, %v205
    %v223 = vsel %vm221, %v211, 2102212464
    %v224 = vsel %vm220, %v208, %v223
    %v225 = vsel %vm219, %v222, %v224
    %v226 = vsel %vm218, %v205, %v208
    %v227 = vsel %vm221, %v214, 920167782
    %v228 = vsel %vm220, %v211, %v227
    %v229 = vsel %vm219, %v226, %v228
    %v230 = vsel %vm218, %v208, %v211
    %v231 = vsel %vm221, %v217, 1326507024
    %v232 = vsel %vm220, %v214, %v231
    %v233 = vsel %vm219, %v230, %v232
    %v234 = vshll.u32 %v194, 8
    %v235 = vmul.u32.u64.compose %v234, %v233
    %v236 = vextract.low.u32 %v235
    %v237 = vextract.high.u32 %v235
    %v238 = vmul.u32.u64.compose %v234, %v229
    %v239 = vextract.low.u32 %v238
    %v240 = vextract.high.u32 %v238
    %v241 = vmul.u32 %v234, %v225
    %v242 = vadd.s32 %v237, %v239
    %vm243 = vc.u32 %v237, %v239
    %v244 = vadd.s32 %v240, 1
    %v245 = vsel %vm243, %v244, %v240
    %v246 = vadd.s32 %v241, %v245
    %v247 = vadd.s32 %v246, 536870912
    %v248 = vshrl.u32 %v247, 30
    %v249 = vshll.u32 %v248, 30
    %v250 = vsub.s32 %v246, %v249
    %vm251 = vcmp.lt.s32.totalorder %v250, 0
    %v252 = vsub.s32 0, %v250
    %v253 = vsel %vm251, %v252, %v250
    %v254 = vclz %v253
    %v255 = vsub.s32 %v254, 2
    %vm256 = vcmp.gt.s32.totalorder 0, %v255
    %v257 = vsel %vm256, 0, %v255
    %v258 = vsub.s32 32, %v257
    %v259 = vshll.u32 %v250, %v257
    %v260 = vshrl.u32 %v242, %v258
    %v261 = vor.u32 %v259, %v260
    %v262 = vsub.s32 4294967266, %v257
    %v263 = vadd.s32 %v262, 127
    %v264 = vshll.u32 %v263, 23
    %v265 = vor.u32 4788187, %v264
    %v266 = vand.u32 2147483647, %v265
    %v268 = vcvt.s32.f32 %v261
    %v269 = vmul.f32 %v268, %v266
    %v270 = vxor.u32 %v269, 2147483648
    %v271 = vsel %vm188, %v270, %v269
    %v272 = vsub.s32 4, %v248
    %v273 = vsel %vm188, %v272, %v248
    %v274 = vsel %vm187, %v82, %v271
    %v275 = vsel %vm187, 0, %v273
    %v276 = vcosq.f32.pop %v274
    %v277 = vsinq.f32.pop %v274
    %vm278 = vweird.f32 %v82
    %v279 = vadd.s32 %v275, 3
    %v280 = vand.u32 %v279, 3
    %vm281 = vcmp.lt.s32.totalorder %v280, 2
    %vm282 = vcmp.eq.s32.totalorder %v280, 0
    %v283 = vxor.u32 %v277, 2147483648
    %v284 = vsel %vm282, %v276, %v283
    %vm285 = vcmp.eq.s32.totalorder %v280, 2
    %v286 = vxor.u32 %v276, 2147483648
    %v287 = vsel %vm285, %v286, %v277
    %v288 = vsel %vm281, %v284, %v287
    %v289 = vsel %vm278, nan, %v288
    %v290 = vld [vmem:[%s3] sm:$0xff]
    %v291 = vld [vmem:[%s3 + $0x8] sm:$0xff]
    %v292 = vld [vmem:[%s3 + $0x10] sm:$0xff]
    %v293 = vld [vmem:[%s3 + $0x18] sm:$0xff]
    %v294 = vld [vmem:[%s4] sm:$0xff]
    %v295 = vld [vmem:[%s4 + $0x8] sm:$0xff]
    %v296 = vld [vmem:[%s4 + $0x10] sm:$0xff]
    %v297 = vld [vmem:[%s4 + $0x18] sm:$0xff]
    %vm298 = vcmask 261120
    %v300 = vsel %vm298, %v289, 0
    %302 = vmatprep.subr.mxu0 0.0
    %303 = vmatpush1.msra.mxu0 %v294
    %304 = vmatprep.subr.mxu0 0.0
    %305 = vmatpush1.msra.mxu0 %v295
    %306 = vmatprep.subr.mxu0 0.0
    %307 = vmatpush1.msra.mxu0 %v296
    %308 = vmatprep.subr.mxu0 0.0
    %309 = vmatpush1.msra.mxu0 %v297
    %310 = vmatprep.subr.mxu0 0.0
    %311 = vmatpush1.msra.mxu0 0.0
    %312 = vmatprep.subr.mxu0 0.0
    %313 = vmatpush1.msra.mxu0 0.0
    %314 = vmatprep.subr.mxu0 0.0
    %315 = vmatpush1.msra.mxu0 0.0
    %316 = vmatprep.subr.mxu0 0.0
    %317 = vmatpush1.msra.mxu0 0.0
    %318 = vmatprep.subr.mxu0 0.0
    %319 = vmatpush1.msra.mxu0 0.0
    %320 = vmatprep.subr.mxu0 0.0
    %321 = vmatpush1.msra.mxu0 0.0
    %322 = vmatprep.subr.mxu0 0.0
    %323 = vmatpush1.msra.mxu0 0.0
    %324 = vmatprep.subr.mxu0 0.0
    %325 = vmatpush1.msra.mxu0 0.0
    %326 = vmatprep.subr.mxu0 0.0
    %327 = vmatpush1.msra.mxu0 0.0
    %328 = vmatprep.subr.mxu0 0.0
    %329 = vmatpush1.msra.mxu0 0.0
    %330 = vmatprep.subr.mxu0 0.0
    %331 = vmatpush1.msra.mxu0 0.0
    %332 = vmatprep.subr.mxu0 0.0
    %333 = vmatpush1.msra.mxu0 0.0
    %334 = vmatprep.subr.mxu0 0.0
    %335 = vmatpush1.msra.mxu0 0.0
    %336 = vmatprep.subr.mxu0 0.0
    %337 = vmatpush1.msra.mxu0 0.0
    %338 = vmatprep.subr.mxu0 0.0
    %339 = vmatpush1.msra.mxu0 0.0
    %340 = vmatprep.subr.mxu0 0.0
    %341 = vmatpush1.msra.mxu0 0.0
    %342 = vmatprep.subr.mxu0 0.0
    %343 = vmatpush1.msra.mxu0 0.0
    %344 = vmatprep.subr.mxu0 0.0
    %345 = vmatpush1.msra.mxu0 0.0
    %346 = vmatprep.subr.mxu0 0.0
    %347 = vmatpush1.msra.mxu0 0.0
    %348 = vmatprep.subr.mxu0 0.0
    %349 = vmatpush1.msra.mxu0 0.0
    %350 = vmatprep.subr.mxu0 0.0
    %351 = vmatpush1.msra.mxu0 0.0
    %352 = vmatprep.subr.mxu0 0.0
    %353 = vmatpush1.msra.mxu0 0.0
    %354 = vmatprep.subr.mxu0 0.0
    %355 = vmatpush1.msra.mxu0 0.0
    %356 = vmatprep.subr.mxu0 0.0
    %357 = vmatpush1.msra.mxu0 0.0
    %358 = vmatprep.subr.mxu0 0.0
    %359 = vmatpush1.msra.mxu0 0.0
    %360 = vmatprep.subr.mxu0 0.0
    %361 = vmatpush1.msra.mxu0 0.0
    %362 = vmatprep.subr.mxu0 0.0
    %363 = vmatpush1.msra.mxu0 0.0
    %364 = vmatprep.subr.mxu0 0.0
    %365 = vmatpush1.msra.mxu0 0.0
    %366 = vmatprep.mubr.f32.mxu0 0.0
    %367 = vmatmul.mubr.f32.gmra.mrb[0].mxu0 %v300
    %v368 = vpop.f32.mrb[0].mxu0
    %v369 = vadd.f32 0.0, %v368
    %v370 = vpop.f32.mrb[0].mxu0
    %371 = vdwg.mxu0
    %v373 = vsel %vm298, %v185, 0
    %375 = vmatprep.subr.mxu0 0.0
    %376 = vmatpush1.msra.mxu0 %v290
    %377 = vmatprep.subr.mxu0 0.0
    %378 = vmatpush1.msra.mxu0 %v291
    %379 = vmatprep.subr.mxu0 0.0
    %380 = vmatpush1.msra.mxu0 %v292
    %381 = vmatprep.subr.mxu0 0.0
    %382 = vmatpush1.msra.mxu0 %v293
    %383 = vmatprep.subr.mxu0 0.0
    %384 = vmatpush1.msra.mxu0 0.0
    %385 = vmatprep.subr.mxu0 0.0
    %386 = vmatpush1.msra.mxu0 0.0
    %387 = vmatprep.subr.mxu0 0.0
    %388 = vmatpush1.msra.mxu0 0.0
    %389 = vmatprep.subr.mxu0 0.0
    %390 = vmatpush1.msra.mxu0 0.0
    %391 = vmatprep.subr.mxu0 0.0
    %392 = vmatpush1.msra.mxu0 0.0
    %393 = vmatprep.subr.mxu0 0.0
    %394 = vmatpush1.msra.mxu0 0.0
    %395 = vmatprep.subr.mxu0 0.0
    %396 = vmatpush1.msra.mxu0 0.0
    %397 = vmatprep.subr.mxu0 0.0
    %398 = vmatpush1.msra.mxu0 0.0
    %399 = vmatprep.subr.mxu0 0.0
    %400 = vmatpush1.msra.mxu0 0.0
    %401 = vmatprep.subr.mxu0 0.0
    %402 = vmatpush1.msra.mxu0 0.0
    %403 = vmatprep.subr.mxu0 0.0
    %404 = vmatpush1.msra.mxu0 0.0
    %405 = vmatprep.subr.mxu0 0.0
    %406 = vmatpush1.msra.mxu0 0.0
    %407 = vmatprep.subr.mxu0 0.0
    %408 = vmatpush1.msra.mxu0 0.0
    %409 = vmatprep.subr.mxu0 0.0
    %410 = vmatpush1.msra.mxu0 0.0
    %411 = vmatprep.subr.mxu0 0.0
    %412 = vmatpush1.msra.mxu0 0.0
    %413 = vmatprep.subr.mxu0 0.0
    %414 = vmatpush1.msra.mxu0 0.0
    %415 = vmatprep.subr.mxu0 0.0
    %416 = vmatpush1.msra.mxu0 0.0
    %417 = vmatprep.subr.mxu0 0.0
    %418 = vmatpush1.msra.mxu0 0.0
    %419 = vmatprep.subr.mxu0 0.0
    %420 = vmatpush1.msra.mxu0 0.0
    %421 = vmatprep.subr.mxu0 0.0
    %422 = vmatpush1.msra.mxu0 0.0
    %423 = vmatprep.subr.mxu0 0.0
    %424 = vmatpush1.msra.mxu0 0.0
    %425 = vmatprep.subr.mxu0 0.0
    %426 = vmatpush1.msra.mxu0 0.0
    %427 = vmatprep.subr.mxu0 0.0
    %428 = vmatpush1.msra.mxu0 0.0
    %429 = vmatprep.subr.mxu0 0.0
    %430 = vmatpush1.msra.mxu0 0.0
    %431 = vmatprep.subr.mxu0 0.0
    %432 = vmatpush1.msra.mxu0 0.0
    %433 = vmatprep.subr.mxu0 0.0
    %434 = vmatpush1.msra.mxu0 0.0
    %435 = vmatprep.subr.mxu0 0.0
    %436 = vmatpush1.msra.mxu0 0.0
    %437 = vmatprep.subr.mxu0 0.0
    %438 = vmatpush1.msra.mxu0 0.0
    %439 = vmatprep.mubr.f32.mxu0 0.0
    %440 = vmatmul.mubr.f32.gmra.mrb[0].mxu0 %v373
    %v441 = vpop.f32.mrb[0].mxu0
    %v442 = vadd.f32 %v369, %v441
    %v443 = vpop.f32.mrb[0].mxu0
    %444 = vdwg.mxu0
    %v445 = vld [vmem:[%s5] sm:$0x1]
    %v447 = vlaneseq
    %v448 = vshrl.u32 %v447, 7
    %v449 = vsub.s32 0, %v448
    %v450 = vrot.slane %v445, %v449
    %v452 = vadd.f32 %v442, %v450
    %v453 = vxor.u32 %v452, 2147483648
    %v454 = vmul.f32 %v453, 1.442695
    %v455 = vpow.pop %v454
    %v456 = vadd.f32 %v455, 1.0
    %v457 = vrcp.pop %v456
    %v458 = vmul.f32 1.0, %v457
    %v459 = vmul.f32 %v452, %v458
    %v460 = vld [vmem:[%s6] sm:$0xff]
    %v461 = vld [vmem:[%s6 + $0x8] sm:$0xff]
    %v462 = vld [vmem:[%s7] sm:$0x1]
    %v464 = vlaneseq
    %v465 = vshrl.u32 %v464, 7
    %v466 = vsub.s32 0, %v465
    %v467 = vrot.slane %v462, %v466
    %vm469 = vcmask 130048
    %v471 = vsel %vm469, %v459, 0
    %473 = vmatprep.subr.mxu0 0.0
    %474 = vmatpush1.msra.mxu0 %v460
    %475 = vmatprep.subr.mxu0 0.0
    %476 = vmatpush1.msra.mxu0 %v461
    %477 = vmatprep.subr.mxu0 0.0
    %478 = vmatpush1.msra.mxu0 0.0
    %479 = vmatprep.subr.mxu0 0.0
    %480 = vmatpush1.msra.mxu0 0.0
    %481 = vmatprep.subr.mxu0 0.0
    %482 = vmatpush1.msra.mxu0 0.0
    %483 = vmatprep.subr.mxu0 0.0
    %484 = vmatpush1.msra.mxu0 0.0
    %485 = vmatprep.subr.mxu0 0.0
    %486 = vmatpush1.msra.mxu0 0.0
    %487 = vmatprep.subr.mxu0 0.0
    %488 = vmatpush1.msra.mxu0 0.0
    %489 = vmatprep.subr.mxu0 0.0
    %490 = vmatpush1.msra.mxu0 0.0
    %491 = vmatprep.subr.mxu0 0.0
    %492 = vmatpush1.msra.mxu0 0.0
    %493 = vmatprep.subr.mxu0 0.0
    %494 = vmatpush1.msra.mxu0 0.0
    %495 = vmatprep.subr.mxu0 0.0
    %496 = vmatpush1.msra.mxu0 0.0
    %497 = vmatprep.subr.mxu0 0.0
    %498 = vmatpush1.msra.mxu0 0.0
    %499 = vmatprep.subr.mxu0 0.0
    %500 = vmatpush1.msra.mxu0 0.0
    %501 = vmatprep.subr.mxu0 0.0
    %502 = vmatpush1.msra.mxu0 0.0
    %503 = vmatprep.subr.mxu0 0.0
    %504 = vmatpush1.msra.mxu0 0.0
    %505 = vmatprep.subr.mxu0 0.0
    %506 = vmatpush1.msra.mxu0 0.0
    %507 = vmatprep.subr.mxu0 0.0
    %508 = vmatpush1.msra.mxu0 0.0
    %509 = vmatprep.subr.mxu0 0.0
    %510 = vmatpush1.msra.mxu0 0.0
    %511 = vmatprep.subr.mxu0 0.0
    %512 = vmatpush1.msra.mxu0 0.0
    %513 = vmatprep.subr.mxu0 0.0
    %514 = vmatpush1.msra.mxu0 0.0
    %515 = vmatprep.subr.mxu0 0.0
    %516 = vmatpush1.msra.mxu0 0.0
    %517 = vmatprep.subr.mxu0 0.0
    %518 = vmatpush1.msra.mxu0 0.0
    %519 = vmatprep.subr.mxu0 0.0
    %520 = vmatpush1.msra.mxu0 0.0
    %521 = vmatprep.subr.mxu0 0.0
    %522 = vmatpush1.msra.mxu0 0.0
    %523 = vmatprep.subr.mxu0 0.0
    %524 = vmatpush1.msra.mxu0 0.0
    %525 = vmatprep.subr.mxu0 0.0
    %526 = vmatpush1.msra.mxu0 0.0
    %527 = vmatprep.subr.mxu0 0.0
    %528 = vmatpush1.msra.mxu0 0.0
    %529 = vmatprep.subr.mxu0 0.0
    %530 = vmatpush1.msra.mxu0 0.0
    %531 = vmatprep.subr.mxu0 0.0
    %532 = vmatpush1.msra.mxu0 0.0
    %533 = vmatprep.subr.mxu0 0.0
    %534 = vmatpush1.msra.mxu0 0.0
    %535 = vmatprep.subr.mxu0 0.0
    %536 = vmatpush1.msra.mxu0 0.0
    %537 = vmatprep.mubr.f32.mxu0 0.0
    %538 = vmatmul.mubr.f32.gmra.mrb[0].mxu0 %v471
    %v539 = vpop.f32.mrb[0].mxu0
    %v540 = vadd.f32 %v467, %v539
    %v541 = vpop.f32.mrb[0].mxu0
    %542 = vdwg.mxu0
    %v543 = vxor.u32 %v540, 2147483648
    %v544 = vmul.f32 %v543, 1.442695
    %v545 = vpow.pop %v544
    %v546 = vadd.f32 %v545, 1.0
    %v547 = vrcp.pop %v546
    %v548 = vmul.f32 1.0, %v547
    %v549 = vmul.f32 %v540, %v548
    %v550 = vld [vmem:[%s8] sm:$0xff]
    %v551 = vld [vmem:[%s8 + $0x8] sm:$0xff]
    %v552 = vld [vmem:[%s9] sm:$0x1]
    %v554 = vlaneseq
    %v555 = vshrl.u32 %v554, 7
    %v556 = vsub.s32 0, %v555
    %v557 = vrot.slane %v552, %v556
    %v560 = vsel %vm469, %v549, 0
    %562 = vmatprep.subr.mxu0 0.0
    %563 = vmatpush1.msra.mxu0 %v550
    %564 = vmatprep.subr.mxu0 0.0
    %565 = vmatpush1.msra.mxu0 %v551
    %566 = vmatprep.subr.mxu0 0.0
    %567 = vmatpush1.msra.mxu0 0.0
    %568 = vmatprep.subr.mxu0 0.0
    %569 = vmatpush1.msra.mxu0 0.0
    %570 = vmatprep.subr.mxu0 0.0
    %571 = vmatpush1.msra.mxu0 0.0
    %572 = vmatprep.subr.mxu0 0.0
    %573 = vmatpush1.msra.mxu0 0.0
    %574 = vmatprep.subr.mxu0 0.0
    %575 = vmatpush1.msra.mxu0 0.0
    %576 = vmatprep.subr.mxu0 0.0
    %577 = vmatpush1.msra.mxu0 0.0
    %578 = vmatprep.subr.mxu0 0.0
    %579 = vmatpush1.msra.mxu0 0.0
    %580 = vmatprep.subr.mxu0 0.0
    %581 = vmatpush1.msra.mxu0 0.0
    %582 = vmatprep.subr.mxu0 0.0
    %583 = vmatpush1.msra.mxu0 0.0
    %584 = vmatprep.subr.mxu0 0.0
    %585 = vmatpush1.msra.mxu0 0.0
    %586 = vmatprep.subr.mxu0 0.0
    %587 = vmatpush1.msra.mxu0 0.0
    %588 = vmatprep.subr.mxu0 0.0
    %589 = vmatpush1.msra.mxu0 0.0
    %590 = vmatprep.subr.mxu0 0.0
    %591 = vmatpush1.msra.mxu0 0.0
    %592 = vmatprep.subr.mxu0 0.0
    %593 = vmatpush1.msra.mxu0 0.0
    %594 = vmatprep.subr.mxu0 0.0
    %595 = vmatpush1.msra.mxu0 0.0
    %596 = vmatprep.subr.mxu0 0.0
    %597 = vmatpush1.msra.mxu0 0.0
    %598 = vmatprep.subr.mxu0 0.0
    %599 = vmatpush1.msra.mxu0 0.0
    %600 = vmatprep.subr.mxu0 0.0
    %601 = vmatpush1.msra.mxu0 0.0
    %602 = vmatprep.subr.mxu0 0.0
    %603 = vmatpush1.msra.mxu0 0.0
    %604 = vmatprep.subr.mxu0 0.0
    %605 = vmatpush1.msra.mxu0 0.0
    %606 = vmatprep.subr.mxu0 0.0
    %607 = vmatpush1.msra.mxu0 0.0
    %608 = vmatprep.subr.mxu0 0.0
    %609 = vmatpush1.msra.mxu0 0.0
    %610 = vmatprep.subr.mxu0 0.0
    %611 = vmatpush1.msra.mxu0 0.0
    %612 = vmatprep.subr.mxu0 0.0
    %613 = vmatpush1.msra.mxu0 0.0
    %614 = vmatprep.subr.mxu0 0.0
    %615 = vmatpush1.msra.mxu0 0.0
    %616 = vmatprep.subr.mxu0 0.0
    %617 = vmatpush1.msra.mxu0 0.0
    %618 = vmatprep.subr.mxu0 0.0
    %619 = vmatpush1.msra.mxu0 0.0
    %620 = vmatprep.subr.mxu0 0.0
    %621 = vmatpush1.msra.mxu0 0.0
    %622 = vmatprep.subr.mxu0 0.0
    %623 = vmatpush1.msra.mxu0 0.0
    %624 = vmatprep.subr.mxu0 0.0
    %625 = vmatpush1.msra.mxu0 0.0
    %626 = vmatprep.mubr.f32.mxu0 0.0
    %627 = vmatmul.mubr.f32.gmra.mrb[0].mxu0 %v560
    %v628 = vpop.f32.mrb[0].mxu0
    %v629 = vadd.f32 %v557, %v628
    %v630 = vpop.f32.mrb[0].mxu0
    %631 = vdwg.mxu0
    %v632 = vld [vmem:[%s1] sm:$0x3]
    %v633 = vld [vmem:[%s10] sm:$0xff]
    %v634 = vld [vmem:[%s10 + $0x8] sm:$0xff]
    %v635 = vld [vmem:[%s11] sm:$0x1]
    %v637 = vlaneseq
    %v638 = vshrl.u32 %v637, 7
    %v639 = vsub.s32 0, %v638
    %v640 = vrot.slane %v635, %v639
    %v643 = vsel %vm469, %v632, 0
    %645 = vmatprep.subr.mxu0 0.0
    %646 = vmatpush1.msra.mxu0 %v633
    %647 = vmatprep.subr.mxu0 0.0
    %648 = vmatpush1.msra.mxu0 %v634
    %649 = vmatprep.subr.mxu0 0.0
    %650 = vmatpush1.msra.mxu0 0.0
    %651 = vmatprep.subr.mxu0 0.0
    %652 = vmatpush1.msra.mxu0 0.0
    %653 = vmatprep.subr.mxu0 0.0
    %654 = vmatpush1.msra.mxu0 0.0
    %655 = vmatprep.subr.mxu0 0.0
    %656 = vmatpush1.msra.mxu0 0.0
    %657 = vmatprep.subr.mxu0 0.0
    %658 = vmatpush1.msra.mxu0 0.0
    %659 = vmatprep.subr.mxu0 0.0
    %660 = vmatpush1.msra.mxu0 0.0
    %661 = vmatprep.subr.mxu0 0.0
    %662 = vmatpush1.msra.mxu0 0.0
    %663 = vmatprep.subr.mxu0 0.0
    %664 = vmatpush1.msra.mxu0 0.0
    %665 = vmatprep.subr.mxu0 0.0
    %666 = vmatpush1.msra.mxu0 0.0
    %667 = vmatprep.subr.mxu0 0.0
    %668 = vmatpush1.msra.mxu0 0.0
    %669 = vmatprep.subr.mxu0 0.0
    %670 = vmatpush1.msra.mxu0 0.0
    %671 = vmatprep.subr.mxu0 0.0
    %672 = vmatpush1.msra.mxu0 0.0
    %673 = vmatprep.subr.mxu0 0.0
    %674 = vmatpush1.msra.mxu0 0.0
    %675 = vmatprep.subr.mxu0 0.0
    %676 = vmatpush1.msra.mxu0 0.0
    %677 = vmatprep.subr.mxu0 0.0
    %678 = vmatpush1.msra.mxu0 0.0
    %679 = vmatprep.subr.mxu0 0.0
    %680 = vmatpush1.msra.mxu0 0.0
    %681 = vmatprep.subr.mxu0 0.0
    %682 = vmatpush1.msra.mxu0 0.0
    %683 = vmatprep.subr.mxu0 0.0
    %684 = vmatpush1.msra.mxu0 0.0
    %685 = vmatprep.subr.mxu0 0.0
    %686 = vmatpush1.msra.mxu0 0.0
    %687 = vmatprep.subr.mxu0 0.0
    %688 = vmatpush1.msra.mxu0 0.0
    %689 = vmatprep.subr.mxu0 0.0
    %690 = vmatpush1.msra.mxu0 0.0
    %691 = vmatprep.subr.mxu0 0.0
    %692 = vmatpush1.msra.mxu0 0.0
    %693 = vmatprep.subr.mxu0 0.0
    %694 = vmatpush1.msra.mxu0 0.0
    %695 = vmatprep.subr.mxu0 0.0
    %696 = vmatpush1.msra.mxu0 0.0
    %697 = vmatprep.subr.mxu0 0.0
    %698 = vmatpush1.msra.mxu0 0.0
    %699 = vmatprep.subr.mxu0 0.0
    %700 = vmatpush1.msra.mxu0 0.0
    %701 = vmatprep.subr.mxu0 0.0
    %702 = vmatpush1.msra.mxu0 0.0
    %703 = vmatprep.subr.mxu0 0.0
    %704 = vmatpush1.msra.mxu0 0.0
    %705 = vmatprep.subr.mxu0 0.0
    %706 = vmatpush1.msra.mxu0 0.0
    %707 = vmatprep.subr.mxu0 0.0
    %708 = vmatpush1.msra.mxu0 0.0
    %709 = vmatprep.mubr.f32.mxu0 0.0
    %710 = vmatmul.mubr.f32.gmra.mrb[0].mxu0 %v643
    %v711 = vpop.f32.mrb[0].mxu0
    %v712 = vadd.f32 %v640, %v711
    %v713 = vpop.f32.mrb[0].mxu0
    %714 = vdwg.mxu0
    %v715 = vadd.f32 %v629, 1.0
    %v716 = vmul.f32 %v712, %v715
    %v717 = vld [vmem:[%s12] sm:$0x1]
    %v718 = vld [vmem:[%s13] sm:$0x1]
    %vm719 = vcmask 254976
    %v720 = vsel %vm719, %v716, 0.0
    %721 = vadd.xlane.f32.xlu0 %v720
    %v722 = vpop.xlane.xlu0 %721
    %v723 = vmul.f32 %v722, 0.03125
    %v724 = vsub.f32 %v716, %v723
    %v725 = vmul.f32 %v724, %v724
    %v726 = vsel %vm719, %v725, 0.0
    %727 = vadd.xlane.f32.xlu0 %v726
    %v728 = vpop.xlane.xlu0 %727
    %v729 = vmul.f32 %v728, 0.03125
    %v730 = vadd.f32 %v729, 1e-05
    %v731 = vrsqrt.pop %v730
    %v732 = vmul.f32 %v724, %v731
    %v734 = vlaneseq
    %v735 = vshrl.u32 %v734, 7
    %v736 = vsub.s32 0, %v735
    %v737 = vrot.slane %v717, %v736
    %v739 = vmul.f32 %v732, %v737
    %v741 = vlaneseq
    %v742 = vshrl.u32 %v741, 7
    %v743 = vsub.s32 0, %v742
    %v744 = vrot.slane %v718, %v743
    %v746 = vadd.f32 %v739, %v744
    %v747 = vxor.u32 %v746, 2147483648
    %v748 = vmul.f32 %v747, 1.442695
    %v749 = vpow.pop %v748
    %v750 = vadd.f32 %v749, 1.0
    %v751 = vrcp.pop %v750
    %v752 = vmul.f32 1.0, %v751
    %v753 = vmul.f32 %v746, %v752
    %v754 = vld [vmem:[%s14] sm:$0xff]
    %v755 = vld [vmem:[%s14 + $0x8] sm:$0xff]
    %v756 = vld [vmem:[%s14 + $0x10] sm:$0xff]
    %v757 = vld [vmem:[%s14 + $0x18] sm:$0xff]
    %v758 = vld [vmem:[%s15] sm:$0xff]
    %v759 = vld [vmem:[%s15 + $0x8] sm:$0xff]
    %760 = vmatprep.subr.mxu0 0.0
    %761 = vmatpush1.msra.mxu0 %v758
    %762 = vmatprep.subr.mxu0 0.0
    %763 = vmatpush1.msra.mxu0 %v759
    %764 = vmatprep.subr.mxu0 0.0
    %765 = vmatpush1.msra.mxu0 0.0
    %766 = vmatprep.subr.mxu0 0.0
    %767 = vmatpush1.msra.mxu0 0.0
    %768 = vmatprep.subr.mxu0 0.0
    %769 = vmatpush1.msra.mxu0 0.0
    %770 = vmatprep.subr.mxu0 0.0
    %771 = vmatpush1.msra.mxu0 0.0
    %772 = vmatprep.subr.mxu0 0.0
    %773 = vmatpush1.msra.mxu0 0.0
    %774 = vmatprep.subr.mxu0 0.0
    %775 = vmatpush1.msra.mxu0 0.0
    %776 = vmatprep.subr.mxu0 0.0
    %777 = vmatpush1.msra.mxu0 0.0
    %778 = vmatprep.subr.mxu0 0.0
    %779 = vmatpush1.msra.mxu0 0.0
    %780 = vmatprep.subr.mxu0 0.0
    %781 = vmatpush1.msra.mxu0 0.0
    %782 = vmatprep.subr.mxu0 0.0
    %783 = vmatpush1.msra.mxu0 0.0
    %784 = vmatprep.subr.mxu0 0.0
    %785 = vmatpush1.msra.mxu0 0.0
    %786 = vmatprep.subr.mxu0 0.0
    %787 = vmatpush1.msra.mxu0 0.0
    %788 = vmatprep.subr.mxu0 0.0
    %789 = vmatpush1.msra.mxu0 0.0
    %790 = vmatprep.subr.mxu0 0.0
    %791 = vmatpush1.msra.mxu0 0.0
    %792 = vmatprep.subr.mxu0 0.0
    %793 = vmatpush1.msra.mxu0 0.0
    %794 = vmatprep.subr.mxu0 0.0
    %795 = vmatpush1.msra.mxu0 0.0
    %796 = vmatprep.subr.mxu0 0.0
    %797 = vmatpush1.msra.mxu0 0.0
    %798 = vmatprep.subr.mxu0 0.0
    %799 = vmatpush1.msra.mxu0 0.0
    %800 = vmatprep.subr.mxu0 0.0
    %801 = vmatpush1.msra.mxu0 0.0
    %802 = vmatprep.subr.mxu0 0.0
    %803 = vmatpush1.msra.mxu0 0.0
    %804 = vmatprep.subr.mxu0 0.0
    %805 = vmatpush1.msra.mxu0 0.0
    %806 = vmatprep.subr.mxu0 0.0
    %807 = vmatpush1.msra.mxu0 0.0
    %808 = vmatprep.subr.mxu0 0.0
    %809 = vmatpush1.msra.mxu0 0.0
    %810 = vmatprep.subr.mxu0 0.0
    %811 = vmatpush1.msra.mxu0 0.0
    %812 = vmatprep.subr.mxu0 0.0
    %813 = vmatpush1.msra.mxu0 0.0
    %814 = vmatprep.subr.mxu0 0.0
    %815 = vmatpush1.msra.mxu0 0.0
    %816 = vmatprep.subr.mxu0 0.0
    %817 = vmatpush1.msra.mxu0 0.0
    %818 = vmatprep.subr.mxu0 0.0
    %819 = vmatpush1.msra.mxu0 0.0
    %820 = vmatprep.subr.mxu0 0.0
    %821 = vmatpush1.msra.mxu0 0.0
    %822 = vmatprep.subr.mxu0 0.0
    %823 = vmatpush1.msra.mxu0 0.0
    %824 = vmatprep.mubr.f32.mxu0 0.0
    %825 = vmatmul.mubr.f32.gmra.mrb[0].mxu0 %v643
    %v826 = vpop.f32.mrb[0].mxu0
    %v827 = vadd.f32 0.0, %v826
    %v828 = vpop.f32.mrb[0].mxu0
    %829 = vdwg.mxu0
    %v831 = vsel %vm298, %v753, 0
    %833 = vmatprep.subr.mxu0 0.0
    %834 = vmatpush1.msra.mxu0 %v754
    %835 = vmatprep.subr.mxu0 0.0
    %836 = vmatpush1.msra.mxu0 %v755
    %837 = vmatprep.subr.mxu0 0.0
    %838 = vmatpush1.msra.mxu0 %v756
    %839 = vmatprep.subr.mxu0 0.0
    %840 = vmatpush1.msra.mxu0 %v757
    %841 = vmatprep.subr.mxu0 0.0
    %842 = vmatpush1.msra.mxu0 0.0
    %843 = vmatprep.subr.mxu0 0.0
    %844 = vmatpush1.msra.mxu0 0.0
    %845 = vmatprep.subr.mxu0 0.0
    %846 = vmatpush1.msra.mxu0 0.0
    %847 = vmatprep.subr.mxu0 0.0
    %848 = vmatpush1.msra.mxu0 0.0
    %849 = vmatprep.subr.mxu0 0.0
    %850 = vmatpush1.msra.mxu0 0.0
    %851 = vmatprep.subr.mxu0 0.0
    %852 = vmatpush1.msra.mxu0 0.0
    %853 = vmatprep.subr.mxu0 0.0
    %854 = vmatpush1.msra.mxu0 0.0
    %855 = vmatprep.subr.mxu0 0.0
    %856 = vmatpush1.msra.mxu0 0.0
    %857 = vmatprep.subr.mxu0 0.0
    %858 = vmatpush1.msra.mxu0 0.0
    %859 = vmatprep.subr.mxu0 0.0
    %860 = vmatpush1.msra.mxu0 0.0
    %861 = vmatprep.subr.mxu0 0.0
    %862 = vmatpush1.msra.mxu0 0.0
    %863 = vmatprep.subr.mxu0 0.0
    %864 = vmatpush1.msra.mxu0 0.0
    %865 = vmatprep.subr.mxu0 0.0
    %866 = vmatpush1.msra.mxu0 0.0
    %867 = vmatprep.subr.mxu0 0.0
    %868 = vmatpush1.msra.mxu0 0.0
    %869 = vmatprep.subr.mxu0 0.0
    %870 = vmatpush1.msra.mxu0 0.0
    %871 = vmatprep.subr.mxu0 0.0
    %872 = vmatpush1.msra.mxu0 0.0
    %873 = vmatprep.subr.mxu0 0.0
    %874 = vmatpush1.msra.mxu0 0.0
    %875 = vmatprep.subr.mxu0 0.0
    %876 = vmatpush1.msra.mxu0 0.0
    %877 = vmatprep.subr.mxu0 0.0
    %878 = vmatpush1.msra.mxu0 0.0
    %879 = vmatprep.subr.mxu0 0.0
    %880 = vmatpush1.msra.mxu0 0.0
    %881 = vmatprep.subr.mxu0 0.0
    %882 = vmatpush1.msra.mxu0 0.0
    %883 = vmatprep.subr.mxu0 0.0
    %884 = vmatpush1.msra.mxu0 0.0
    %885 = vmatprep.subr.mxu0 0.0
    %886 = vmatpush1.msra.mxu0 0.0
    %887 = vmatprep.subr.mxu0 0.0
    %888 = vmatpush1.msra.mxu0 0.0
    %889 = vmatprep.subr.mxu0 0.0
    %890 = vmatpush1.msra.mxu0 0.0
    %891 = vmatprep.subr.mxu0 0.0
    %892 = vmatpush1.msra.mxu0 0.0
    %893 = vmatprep.subr.mxu0 0.0
    %894 = vmatpush1.msra.mxu0 0.0
    %895 = vmatprep.subr.mxu0 0.0
    %896 = vmatpush1.msra.mxu0 0.0
    %897 = vmatprep.mubr.f32.mxu0 0.0
    %898 = vmatmul.mubr.f32.gmra.mrb[0].mxu0 %v831
    %v899 = vpop.f32.mrb[0].mxu0
    %v900 = vadd.f32 %v827, %v899
    %v901 = vpop.f32.mrb[0].mxu0
    %902 = vdwg.mxu0
    %v903 = vld [vmem:[%s16] sm:$0x1]
    %v905 = vlaneseq
    %v906 = vshrl.u32 %v905, 7
    %v907 = vsub.s32 0, %v906
    %v908 = vrot.slane %v903, %v907
    %v910 = vadd.f32 %v900, %v908
    %912 = vrot.lane.b32.xlu0 %v715, 96
    %v913 = vpop.permute.xlu0 %912
    %v915 = vmul.f32 %v910, %v913
    %v916 = vld [vmem:[%s17] sm:$0x1]
    %v917 = vld [vmem:[%s18] sm:$0x1]
    %v918 = vsel %vm719, %v915, 0.0
    %919 = vadd.xlane.f32.xlu0 %v918
    %v920 = vpop.xlane.xlu0 %919
    %v921 = vmul.f32 %v920, 0.03125
    %v922 = vsub.f32 %v915, %v921
    %v923 = vmul.f32 %v922, %v922
    %v924 = vsel %vm719, %v923, 0.0
    %925 = vadd.xlane.f32.xlu0 %v924
    %v926 = vpop.xlane.xlu0 %925
    %v927 = vmul.f32 %v926, 0.03125
    %v928 = vadd.f32 %v927, 1e-05
    %v929 = vrsqrt.pop %v928
    %v930 = vmul.f32 %v922, %v929
    %v932 = vlaneseq
    %v933 = vshrl.u32 %v932, 7
    %v934 = vsub.s32 0, %v933
    %v935 = vrot.slane %v916, %v934
    %v937 = vmul.f32 %v930, %v935
    %v939 = vlaneseq
    %v940 = vshrl.u32 %v939, 7
    %v941 = vsub.s32 0, %v940
    %v942 = vrot.slane %v917, %v941
    %v944 = vadd.f32 %v937, %v942
    %v945 = vxor.u32 %v944, 2147483648
    %v946 = vmul.f32 %v945, 1.442695
    %v947 = vpow.pop %v946
    %v948 = vadd.f32 %v947, 1.0
    %v949 = vrcp.pop %v948
    %v950 = vmul.f32 1.0, %v949
    %v951 = vmul.f32 %v944, %v950
    %v952 = vld [vmem:[%s19] sm:$0xff]
    %v953 = vld [vmem:[%s19 + $0x8] sm:$0xff]
    %v954 = vld [vmem:[%s19 + $0x10] sm:$0xff]
    %v955 = vld [vmem:[%s19 + $0x18] sm:$0xff]
    %v956 = vld [vmem:[%s20] sm:$0x1]
    %v958 = vlaneseq
    %v959 = vshrl.u32 %v958, 7
    %v960 = vsub.s32 0, %v959
    %v961 = vrot.slane %v956, %v960
    %v964 = vsel %vm298, %v951, 0
    %966 = vmatprep.subr.mxu0 0.0
    %967 = vmatpush1.msra.mxu0 %v952
    %968 = vmatprep.subr.mxu0 0.0
    %969 = vmatpush1.msra.mxu0 %v953
    %970 = vmatprep.subr.mxu0 0.0
    %971 = vmatpush1.msra.mxu0 %v954
    %972 = vmatprep.subr.mxu0 0.0
    %973 = vmatpush1.msra.mxu0 %v955
    %974 = vmatprep.subr.mxu0 0.0
    %975 = vmatpush1.msra.mxu0 0.0
    %976 = vmatprep.subr.mxu0 0.0
    %977 = vmatpush1.msra.mxu0 0.0
    %978 = vmatprep.subr.mxu0 0.0
    %979 = vmatpush1.msra.mxu0 0.0
    %980 = vmatprep.subr.mxu0 0.0
    %981 = vmatpush1.msra.mxu0 0.0
    %982 = vmatprep.subr.mxu0 0.0
    %983 = vmatpush1.msra.mxu0 0.0
    %984 = vmatprep.subr.mxu0 0.0
    %985 = vmatpush1.msra.mxu0 0.0
    %986 = vmatprep.subr.mxu0 0.0
    %987 = vmatpush1.msra.mxu0 0.0
    %988 = vmatprep.subr.mxu0 0.0
    %989 = vmatpush1.msra.mxu0 0.0
    %990 = vmatprep.subr.mxu0 0.0
    %991 = vmatpush1.msra.mxu0 0.0
    %992 = vmatprep.subr.mxu0 0.0
    %993 = vmatpush1.msra.mxu0 0.0
    %994 = vmatprep.subr.mxu0 0.0
    %995 = vmatpush1.msra.mxu0 0.0
    %996 = vmatprep.subr.mxu0 0.0
    %997 = vmatpush1.msra.mxu0 0.0
    %998 = vmatprep.subr.mxu0 0.0
    %999 = vmatpush1.msra.mxu0 0.0
    %1000 = vmatprep.subr.mxu0 0.0
    %1001 = vmatpush1.msra.mxu0 0.0
    %1002 = vmatprep.subr.mxu0 0.0
    %1003 = vmatpush1.msra.mxu0 0.0
    %1004 = vmatprep.subr.mxu0 0.0
    %1005 = vmatpush1.msra.mxu0 0.0
    %1006 = vmatprep.subr.mxu0 0.0
    %1007 = vmatpush1.msra.mxu0 0.0
    %1008 = vmatprep.subr.mxu0 0.0
    %1009 = vmatpush1.msra.mxu0 0.0
    %1010 = vmatprep.subr.mxu0 0.0
    %1011 = vmatpush1.msra.mxu0 0.0
    %1012 = vmatprep.subr.mxu0 0.0
    %1013 = vmatpush1.msra.mxu0 0.0
    %1014 = vmatprep.subr.mxu0 0.0
    %1015 = vmatpush1.msra.mxu0 0.0
    %1016 = vmatprep.subr.mxu0 0.0
    %1017 = vmatpush1.msra.mxu0 0.0
    %1018 = vmatprep.subr.mxu0 0.0
    %1019 = vmatpush1.msra.mxu0 0.0
    %1020 = vmatprep.subr.mxu0 0.0
    %1021 = vmatpush1.msra.mxu0 0.0
    %1022 = vmatprep.subr.mxu0 0.0
    %1023 = vmatpush1.msra.mxu0 0.0
    %1024 = vmatprep.subr.mxu0 0.0
    %1025 = vmatpush1.msra.mxu0 0.0
    %1026 = vmatprep.subr.mxu0 0.0
    %1027 = vmatpush1.msra.mxu0 0.0
    %1028 = vmatprep.subr.mxu0 0.0
    %1029 = vmatpush1.msra.mxu0 0.0
    %1030 = vmatprep.mubr.f32.mxu0 0.0
    %1031 = vmatmul.mubr.f32.gmra.mrb[0].mxu0 %v964
    %v1032 = vpop.f32.mrb[0].mxu0
    %v1033 = vadd.f32 %v961, %v1032
    %v1034 = vpop.f32.mrb[0].mxu0
    %1035 = vdwg.mxu0
    %vm1036 = vcmask 123904
    %1037 = vst.msk [vmem:[#allocation2] sm:$0x3] %vm1036, %v1033
    // Predicated region
    $region86: #{mlp_skip_net_forward.1} parent=1 // pred_check
      _
    $region87: #{mlp_skip_net_forward.1} parent=1 // pred_check_branch
      %1039 = sbr.rel (0) target = $region89
    $region88: #{mlp_skip_net_forward.1} parent=1 // pred_region
      %s1041 = ssub.s32 32, 32
      %1042 = vsyncadd [#allocation3], %s1041
      %s1044 = sshll.u32 [#allocation2], 4
      %s1045 = int_to_ptr.vmem [resolvable:$true] %s1044
      %1047 = dma.vmem_to_hbm [thread:$0]  %s1045, 32, %s21, [#allocation3]
    $region89: #{mlp_skip_net_forward.1} parent=1 // pred_fallthru
      _
    // Predicated region
    $region90: #{mlp_skip_net_forward.1} parent=1 // pred_check
      _
    $region91: #{mlp_skip_net_forward.1} parent=1 // pred_check_branch
      %1049 = sbr.rel (0) target = $region93
    $region92: #{mlp_skip_net_forward.1} parent=1 // pred_region
      %1050 = dma.done [#allocation3], 32
    $region93: #{mlp_skip_net_forward.1} parent=1 // pred_fallthru
      _
    %1051 = vsyncpa [#allocation3], 1

</llo_original>
